<compile_context>
chip_gen: v7x
topology: tpu7x:2x2x1
jax: 0.10.0
libtpu: 0.0.40
codegen_flags: <defaults>
</compile_context>

<pallas_src>
import jax
import jax.numpy as jnp
from jax.experimental import pallas as pl
from jax.experimental.pallas import tpu as pltpu

INPUT_DIM = 121
HIDDEN = 128
NUM_LAYERS = 7
OUTPUT_DIM = 55
EPS = 1e-5

SEG = 128                                # lane-aligned segment width
CONCAT_W = SEG * NUM_LAYERS              # 896: segments 0..6 (x, h0..h5); h6 is never re-read
CONCAT_FULL = SEG * (NUM_LAYERS + 1)     # 1024: padded K of the final projection
OUT_PAD = 128                            # padded output lane width (real = 55)
NUM_PAIRS = (NUM_LAYERS + 1) // 2        # 4 pairs: (0,1) (2,3) (4,5) (6,final)

# Paired weight-slab layout: pair j owns a (PAIR_K[j], 256) block = [W_{2j} | W_{2j+1}[:k]],
# stacked row-wise; the four 128x128 "correction" blocks W_{2j+1}[k:k+128] live separately.
PAIR_K = [SEG * (2 * j + 1) for j in range(NUM_PAIRS)]       # [128, 384, 640, 896]
PAIR_OFF = [0]
for _k in PAIR_K[:-1]:
    PAIR_OFF.append(PAIR_OFF[-1] + _k)
PAIR_ROWS = PAIR_OFF[-1] + PAIR_K[-1]                        # 2048 rows * 256 lanes * bf16 ~ 1 MB

TILE_M_MAX = 512                         # batch tile; VMEM-safe on v5e/v6e/v7x default limits


# ----------------------------------------------------------------------------- kernel
def dense_skip_kernel(x_ref, sh_ref, bf_ref, wpair_ref, wcorr_ref, out_ref, concat_ref):
    # Segment 0 of the bf16 concat = x (already bf16; cols 121..127 and rows >= B arrive
    # zero-padded from the wrapper, so every concat column ever read is initialized).
    concat_ref[:, pl.ds(0, SEG)] = x_ref[...]

    for j in range(NUM_PAIRS):                   # static unrolled loop over layer pairs
        i = 2 * j
        k = PAIR_K[j]                            # concat width read by layer i (= SEG*(i+1))

        # One N=256 MXU pass: left half -> full pre-activation of layer i,
        # right half -> partial pre-activation of layer i+1 / final (segments 0..i only).
        p = jnp.dot(concat_ref[:, pl.ds(0, k)],
                    wpair_ref[pl.ds(PAIR_OFF[j], k), :],
                    preferred_element_type=jnp.float32)

        # Layer i: linear bias + eval-mode BN folded into W (scale) and sh_ref (shift); ReLU.
        h = jnp.maximum(p[:, :SEG] + sh_ref[i], 0.0)      # dropout p=0 -> identity
        h_bf = h.astype(jnp.bfloat16)                      # single cast of the fresh segment

        # Finish layer i+1 (or the final projection) with the 128x128 correction matmul.
        corr = jnp.dot(h_bf, wcorr_ref[j], preferred_element_type=jnp.float32)

        if j < NUM_PAIRS - 1:
            concat_ref[:, pl.ds(k, SEG)] = h_bf
            h2 = jnp.maximum(p[:, SEG:] + corr + sh_ref[i + 1], 0.0)
            concat_ref[:, pl.ds(k + SEG, SEG)] = h2.astype(jnp.bfloat16)
        else:
            # Pair (6, final): right half + correction is the final projection over all 1024
            # padded concat rows; h6 never needs to be written back to the concat.
            out_ref[...] = p[:, SEG:] + corr + bf_ref[...]


# ----------------------------------------------------------------------------- params
def init_params(key):
    """Deterministic synthetic parameters with the shapes implied by DenseSkipNet.__init__."""
    layers = []
    in_dim = INPUT_DIM
    for _ in range(NUM_LAYERS):
        key, k1, k2, k3, k4, k5, k6 = jax.random.split(key, 7)
        W = 0.05 * jax.random.normal(k1, (in_dim, HIDDEN), jnp.float32)   # (in, out) layout
        b = 0.05 * jax.random.normal(k2, (HIDDEN,), jnp.float32)
        gamma = 1.0 + 0.1 * jax.random.normal(k3, (HIDDEN,), jnp.float32)
        beta = 0.1 * jax.random.normal(k4, (HIDDEN,), jnp.float32)
        mean = 0.1 * jax.random.normal(k5, (HIDDEN,), jnp.float32)
        var = jax.random.uniform(k6, (HIDDEN,), jnp.float32, 0.5, 1.5)
        layers.append(dict(W=W, b=b, gamma=gamma, beta=beta, mean=mean, var=var))
        in_dim += HIDDEN
    key, k1, k2 = jax.random.split(key, 3)
    Wf = 0.05 * jax.random.normal(k1, (in_dim, OUTPUT_DIM), jnp.float32)
    bf = 0.05 * jax.random.normal(k2, (OUTPUT_DIM,), jnp.float32)
    return dict(layers=layers, Wf=Wf, bf=bf)


def prepare_packed_params(params):
    """Host-side, ONE-TIME weight re-layout (kept out of the per-call path):
    fold eval-mode BN into the weights and a single per-layer shift, lay each layer's weight
    out against the padded concat rows, then pair layers (i, i+1) into bf16 (k, 256) blocks
    plus 128x128 correction blocks for the N=256 MXU path."""
    assert NUM_LAYERS % 2 == 1, "pairing below assumes the final projection closes the last pair"
    Wp_list, shifts = [], []
    for i, lyr in enumerate(params["layers"]):
        scale = lyr["gamma"] / jnp.sqrt(lyr["var"] + EPS)
        Ws = lyr["W"] * scale[None, :]                        # fold BN scale into W
        k = SEG * (i + 1)
        Wpk = jnp.zeros((k, SEG), jnp.float32)
        Wpk = Wpk.at[:INPUT_DIM, :].set(Ws[:INPUT_DIM, :])    # input segment (+7 zero rows)
        if i > 0:
            Wpk = Wpk.at[SEG:, :].set(Ws[INPUT_DIM:, :])      # hidden segments (contiguous)
        Wp_list.append(Wpk)
        shifts.append(scale * lyr["b"] + lyr["beta"] - scale * lyr["mean"])

    Wf = params["Wf"]
    Wfp = jnp.zeros((CONCAT_FULL, OUT_PAD), jnp.float32)
    Wfp = Wfp.at[:INPUT_DIM, :OUTPUT_DIM].set(Wf[:INPUT_DIM, :])
    Wfp = Wfp.at[SEG:, :OUTPUT_DIM].set(Wf[INPUT_DIM:, :])
    Wp_list.append(Wfp)                                       # behaves like "layer 7"

    pair_blocks, corr_blocks = [], []
    for j in range(NUM_PAIRS):
        k = PAIR_K[j]
        left = Wp_list[2 * j]                                  # (k, 128)
        right_full = Wp_list[2 * j + 1]                        # (k + 128, 128)
        pair_blocks.append(jnp.concatenate([left, right_full[:k, :]], axis=1))  # (k, 256)
        corr_blocks.append(right_full[k:, :])                  # (128, 128)

    w_pair = jnp.concatenate(pair_blocks, axis=0).astype(jnp.bfloat16)   # (2048, 256) bf16
    w_corr = jnp.stack(corr_blocks).astype(jnp.bfloat16)                 # (4, 128, 128) bf16
    sh = jnp.stack(shifts)[:, None, :].astype(jnp.float32)               # (7, 1, 128) f32
    bfp = jnp.zeros((1, OUT_PAD), jnp.float32).at[0, :OUTPUT_DIM].set(params["bf"])
    return dict(w_pair=w_pair, w_corr=w_corr, shift=sh, bf=bfp)


# ----------------------------------------------------------------------------- wrapper
@jax.jit
def dense_skip_forward(x, packed):
    """x: (B, 121) f32, packed = prepare_packed_params(...)  ->  (B, 55) f32."""
    B = x.shape[0]
    b16 = ((max(B, 1) + 15) // 16) * 16              # bf16 sublane-tile multiple
    tile_m = min(TILE_M_MAX, b16)                    # batch tile; weights stay VMEM-resident
    Bp = ((b16 + tile_m - 1) // tile_m) * tile_m
    x_p = jnp.zeros((Bp, SEG), jnp.bfloat16).at[:B, :INPUT_DIM].set(x.astype(jnp.bfloat16))

    out_p = pl.pallas_call(
        dense_skip_kernel,
        out_shape=jax.ShapeDtypeStruct((Bp, OUT_PAD), jnp.float32),
        grid=(Bp // tile_m,),
        in_specs=[
            pl.BlockSpec((tile_m, SEG), lambda m: (m, 0)),                 # x tile (bf16)
            pl.BlockSpec((NUM_LAYERS, 1, SEG), lambda m: (0, 0, 0)),       # per-layer shifts
            pl.BlockSpec((1, OUT_PAD), lambda m: (0, 0)),                  # final bias
            # Weights as regular VMEM inputs with constant block index: Pallas prefetches them
            # in the prologue and does not re-DMA across batch tiles; megacore-safe (each core
            # fetches its own ~1 MB copy), so the batch axis can be "parallel".
            pl.BlockSpec((PAIR_ROWS, 2 * SEG), lambda m: (0, 0)),          # paired weight slab
            pl.BlockSpec((NUM_PAIRS, SEG, SEG), lambda m: (0, 0, 0)),      # correction blocks
        ],
        out_specs=pl.BlockSpec((tile_m, OUT_PAD), lambda m: (m, 0)),
        scratch_shapes=[
            pltpu.VMEM((tile_m, CONCAT_W), jnp.bfloat16),   # growing bf16 concat activations
        ],
        compiler_params=pltpu.CompilerParams(
            dimension_semantics=("parallel",),              # both TCs on v7x at large batch
        ),
    )(x_p, packed["shift"], packed["bf"], packed["w_pair"], packed["w_corr"])
    return out_p[:B, :OUTPUT_DIM]


# ----------------------------------------------------------------------------- reference
def dense_skip_reference(x, params):
    concat = x
    for lyr in params["layers"]:
        out = concat @ lyr["W"] + lyr["b"]
        out = (out - lyr["mean"]) / jnp.sqrt(lyr["var"] + EPS) * lyr["gamma"] + lyr["beta"]
        out = jnp.maximum(out, 0.0)
        concat = jnp.concatenate([concat, out], axis=1)
    return concat @ params["Wf"] + params["bf"]


# ----------------------------------------------------------------------------- main
if __name__ == "__main__":
    key = jax.random.PRNGKey(0)
    key, kx, kp = jax.random.split(key, 3)

    B = 4
    x = jax.random.normal(kx, (B, INPUT_DIM), jnp.float32)
    params = init_params(kp)
    packed = prepare_packed_params(params)          # host-side re-layout, done once

    y = dense_skip_forward(x, packed)
    y = jax.block_until_ready(y)

    y_ref = dense_skip_reference(x, params)         # pure f32 reference (module semantics)
    assert y.shape == (B, OUTPUT_DIM), y.shape
    # Weights and activations feed the MXU in bf16 (f32 accumulation), so compare against the
    # f32 reference with a correspondingly loosened tolerance (expected rel. error ~1e-2).
    assert jnp.allclose(y, y_ref, rtol=3e-2, atol=3e-2), float(jnp.max(jnp.abs(y - y_ref)))

    print("KERNEL_OK")
</pallas_src>

<mosaic_0001>
module attributes {stable_mosaic.version = 11 : i64} {
  func.func @dense_skip_kernel(%arg0: i32, %arg1: memref<16x128xbf16, #tpu.memory_space<vmem>>, %arg2: memref<7x1x128xf32, #tpu.memory_space<vmem>>, %arg3: memref<1x128xf32, #tpu.memory_space<vmem>>, %arg4: memref<2048x256xbf16, #tpu.memory_space<vmem>>, %arg5: memref<4x128x128xbf16, #tpu.memory_space<vmem>>, %arg6: memref<16x128xf32, #tpu.memory_space<vmem>>, %arg7: memref<16x896xbf16, #tpu.memory_space<vmem>>) attributes {dimension_semantics = [#tpu.dimension_semantics<parallel>], iteration_bounds = array<i64: 1>, scalar_prefetch = 0 : i64, scratch_operands = 1 : i64, tpu.core_type = #tpu.core_type<tc>, window_params = [{transform_indices = @transform_0, window_bounds = array<i64: 16, 128>}, {pipeline_mode = #tpu.pipeline_mode<synchronous>, transform_indices = @transform_1, window_bounds = array<i64: 7, 1, 128>}, {pipeline_mode = #tpu.pipeline_mode<synchronous>, transform_indices = @transform_2, window_bounds = array<i64: 1, 128>}, {pipeline_mode = #tpu.pipeline_mode<synchronous>, transform_indices = @transform_3, window_bounds = array<i64: 2048, 256>}, {pipeline_mode = #tpu.pipeline_mode<synchronous>, transform_indices = @transform_4, window_bounds = array<i64: 4, 128, 128>}, {transform_indices = @transform_5, window_bounds = array<i64: 16, 128>}]} {
    %c0 = arith.constant 0 : index
    %c0_0 = arith.constant 0 : index
    %0 = vector.load %arg1[%c0, %c0_0] : memref<16x128xbf16, #tpu.memory_space<vmem>>, vector<16x128xbf16>
    %c0_1 = arith.constant 0 : index
    %c0_2 = arith.constant 0 : index
    %1 = vector.load %arg7[%c0_1, %c0_2] : memref<16x896xbf16, #tpu.memory_space<vmem>>, vector<16x128xbf16>
    tpu.vector_store %arg7[%c0_1, %c0_2], %0 {strides = array<i32>} : memref<16x896xbf16, #tpu.memory_space<vmem>>, vector<16x128xbf16>,
    %c0_3 = arith.constant 0 : index
    %c0_4 = arith.constant 0 : index
    %2 = vector.load %arg7[%c0_3, %c0_4] : memref<16x896xbf16, #tpu.memory_space<vmem>>, vector<16x128xbf16>
    %c0_5 = arith.constant 0 : index
    %c0_6 = arith.constant 0 : index
    %3 = vector.load %arg4[%c0_5, %c0_6] : memref<2048x256xbf16, #tpu.memory_space<vmem>>, vector<128x256xbf16>
    %cst = arith.constant dense<0.000000e+00> : vector<16x256xf32>
    %4 = tpu.matmul %2, %3, %cst {dimension_numbers = #tpu.dot_dimension_numbers<[1], [0], [0], [1], [0, 0, 1, 1], [], []>} : vector<16x128xbf16>, vector<128x256xbf16>, vector<16x256xf32> -> vector<16x256xf32>
    %5 = vector.extract_strided_slice %4 {offsets = [0, 0], sizes = [16, 128], strides = [1, 1]} : vector<16x256xf32> to vector<16x128xf32>
    %c0_7 = arith.constant 0 : index
    %c0_8 = arith.constant 0 : index
    %c0_9 = arith.constant 0 : index
    %6 = vector.load %arg2[%c0_7, %c0_8, %c0_9] : memref<7x1x128xf32, #tpu.memory_space<vmem>>, vector<1x1x128xf32>
    %7 = vector.shape_cast %6 : vector<1x1x128xf32> to vector<1x128xf32>
    %8 = vector.broadcast %7 : vector<1x128xf32> to vector<16x128xf32>
    %9 = arith.addf %5, %8 : vector<16x128xf32>
    %cst_10 = arith.constant 0.000000e+00 : f32
    %10 = vector.broadcast %cst_10 : f32 to vector<16x128xf32>
    %11 = arith.maximumf %9, %10 : vector<16x128xf32>
    %12 = arith.truncf %11 : vector<16x128xf32> to vector<16x128xbf16>
    %c0_11 = arith.constant 0 : index
    %c0_12 = arith.constant 0 : index
    %c0_13 = arith.constant 0 : index
    %13 = vector.load %arg5[%c0_11, %c0_12, %c0_13] : memref<4x128x128xbf16, #tpu.memory_space<vmem>>, vector<1x128x128xbf16>
    %14 = vector.shape_cast %13 : vector<1x128x128xbf16> to vector<128x128xbf16>
    %cst_14 = arith.constant dense<0.000000e+00> : vector<16x128xf32>
    %15 = tpu.matmul %12, %14, %cst_14 {dimension_numbers = #tpu.dot_dimension_numbers<[1], [0], [0], [1], [0, 0, 1, 1], [], []>} : vector<16x128xbf16>, vector<128x128xbf16>, vector<16x128xf32> -> vector<16x128xf32>
    %c0_15 = arith.constant 0 : index
    %c128 = arith.constant 128 : index
    %16 = vector.load %arg7[%c0_15, %c128] : memref<16x896xbf16, #tpu.memory_space<vmem>>, vector<16x128xbf16>
    tpu.vector_store %arg7[%c0_15, %c128], %12 {strides = array<i32>} : memref<16x896xbf16, #tpu.memory_space<vmem>>, vector<16x128xbf16>,
    %17 = vector.extract_strided_slice %4 {offsets = [0, 128], sizes = [16, 128], strides = [1, 1]} : vector<16x256xf32> to vector<16x128xf32>
    %18 = arith.addf %17, %15 : vector<16x128xf32>
    %c1 = arith.constant 1 : index
    %c0_16 = arith.constant 0 : index
    %c0_17 = arith.constant 0 : index
    %19 = vector.load %arg2[%c1, %c0_16, %c0_17] : memref<7x1x128xf32, #tpu.memory_space<vmem>>, vector<1x1x128xf32>
    %20 = vector.shape_cast %19 : vector<1x1x128xf32> to vector<1x128xf32>
    %21 = vector.broadcast %20 : vector<1x128xf32> to vector<16x128xf32>
    %22 = arith.addf %18, %21 : vector<16x128xf32>
    %cst_18 = arith.constant 0.000000e+00 : f32
    %23 = vector.broadcast %cst_18 : f32 to vector<16x128xf32>
    %24 = arith.maximumf %22, %23 : vector<16x128xf32>
    %25 = arith.truncf %24 : vector<16x128xf32> to vector<16x128xbf16>
    %c0_19 = arith.constant 0 : index
    %c256 = arith.constant 256 : index
    %26 = vector.load %arg7[%c0_19, %c256] : memref<16x896xbf16, #tpu.memory_space<vmem>>, vector<16x128xbf16>
    tpu.vector_store %arg7[%c0_19, %c256], %25 {strides = array<i32>} : memref<16x896xbf16, #tpu.memory_space<vmem>>, vector<16x128xbf16>,
    %c0_20 = arith.constant 0 : index
    %c0_21 = arith.constant 0 : index
    %27 = vector.load %arg7[%c0_20, %c0_21] : memref<16x896xbf16, #tpu.memory_space<vmem>>, vector<16x384xbf16>
    %c128_22 = arith.constant 128 : index
    %c0_23 = arith.constant 0 : index
    %28 = vector.load %arg4[%c128_22, %c0_23] : memref<2048x256xbf16, #tpu.memory_space<vmem>>, vector<384x256xbf16>
    %cst_24 = arith.constant dense<0.000000e+00> : vector<16x256xf32>
    %29 = tpu.matmul %27, %28, %cst_24 {dimension_numbers = #tpu.dot_dimension_numbers<[1], [0], [0], [1], [0, 0, 1, 1], [], []>} : vector<16x384xbf16>, vector<384x256xbf16>, vector<16x256xf32> -> vector<16x256xf32>
    %30 = vector.extract_strided_slice %29 {offsets = [0, 0], sizes = [16, 128], strides = [1, 1]} : vector<16x256xf32> to vector<16x128xf32>
    %c2 = arith.constant 2 : index
    %c0_25 = arith.constant 0 : index
    %c0_26 = arith.constant 0 : index
    %31 = vector.load %arg2[%c2, %c0_25, %c0_26] : memref<7x1x128xf32, #tpu.memory_space<vmem>>, vector<1x1x128xf32>
    %32 = vector.shape_cast %31 : vector<1x1x128xf32> to vector<1x128xf32>
    %33 = vector.broadcast %32 : vector<1x128xf32> to vector<16x128xf32>
    %34 = arith.addf %30, %33 : vector<16x128xf32>
    %cst_27 = arith.constant 0.000000e+00 : f32
    %35 = vector.broadcast %cst_27 : f32 to vector<16x128xf32>
    %36 = arith.maximumf %34, %35 : vector<16x128xf32>
    %37 = arith.truncf %36 : vector<16x128xf32> to vector<16x128xbf16>
    %c1_28 = arith.constant 1 : index
    %c0_29 = arith.constant 0 : index
    %c0_30 = arith.constant 0 : index
    %38 = vector.load %arg5[%c1_28, %c0_29, %c0_30] : memref<4x128x128xbf16, #tpu.memory_space<vmem>>, vector<1x128x128xbf16>
    %39 = vector.shape_cast %38 : vector<1x128x128xbf16> to vector<128x128xbf16>
    %cst_31 = arith.constant dense<0.000000e+00> : vector<16x128xf32>
    %40 = tpu.matmul %37, %39, %cst_31 {dimension_numbers = #tpu.dot_dimension_numbers<[1], [0], [0], [1], [0, 0, 1, 1], [], []>} : vector<16x128xbf16>, vector<128x128xbf16>, vector<16x128xf32> -> vector<16x128xf32>
    %c0_32 = arith.constant 0 : index
    %c384 = arith.constant 384 : index
    %41 = vector.load %arg7[%c0_32, %c384] : memref<16x896xbf16, #tpu.memory_space<vmem>>, vector<16x128xbf16>
    tpu.vector_store %arg7[%c0_32, %c384], %37 {strides = array<i32>} : memref<16x896xbf16, #tpu.memory_space<vmem>>, vector<16x128xbf16>,
    %42 = vector.extract_strided_slice %29 {offsets = [0, 128], sizes = [16, 128], strides = [1, 1]} : vector<16x256xf32> to vector<16x128xf32>
    %43 = arith.addf %42, %40 : vector<16x128xf32>
    %c3 = arith.constant 3 : index
    %c0_33 = arith.constant 0 : index
    %c0_34 = arith.constant 0 : index
    %44 = vector.load %arg2[%c3, %c0_33, %c0_34] : memref<7x1x128xf32, #tpu.memory_space<vmem>>, vector<1x1x128xf32>
    %45 = vector.shape_cast %44 : vector<1x1x128xf32> to vector<1x128xf32>
    %46 = vector.broadcast %45 : vector<1x128xf32> to vector<16x128xf32>
    %47 = arith.addf %43, %46 : vector<16x128xf32>
    %cst_35 = arith.constant 0.000000e+00 : f32
    %48 = vector.broadcast %cst_35 : f32 to vector<16x128xf32>
    %49 = arith.maximumf %47, %48 : vector<16x128xf32>
    %50 = arith.truncf %49 : vector<16x128xf32> to vector<16x128xbf16>
    %c0_36 = arith.constant 0 : index
    %c512 = arith.constant 512 : index
    %51 = vector.load %arg7[%c0_36, %c512] : memref<16x896xbf16, #tpu.memory_space<vmem>>, vector<16x128xbf16>
    tpu.vector_store %arg7[%c0_36, %c512], %50 {strides = array<i32>} : memref<16x896xbf16, #tpu.memory_space<vmem>>, vector<16x128xbf16>,
    %c0_37 = arith.constant 0 : index
    %c0_38 = arith.constant 0 : index
    %52 = vector.load %arg7[%c0_37, %c0_38] : memref<16x896xbf16, #tpu.memory_space<vmem>>, vector<16x640xbf16>
    %c512_39 = arith.constant 512 : index
    %c0_40 = arith.constant 0 : index
    %53 = vector.load %arg4[%c512_39, %c0_40] : memref<2048x256xbf16, #tpu.memory_space<vmem>>, vector<640x256xbf16>
    %cst_41 = arith.constant dense<0.000000e+00> : vector<16x256xf32>
    %54 = tpu.matmul %52, %53, %cst_41 {dimension_numbers = #tpu.dot_dimension_numbers<[1], [0], [0], [1], [0, 0, 1, 1], [], []>} : vector<16x640xbf16>, vector<640x256xbf16>, vector<16x256xf32> -> vector<16x256xf32>
    %55 = vector.extract_strided_slice %54 {offsets = [0, 0], sizes = [16, 128], strides = [1, 1]} : vector<16x256xf32> to vector<16x128xf32>
    %c4 = arith.constant 4 : index
    %c0_42 = arith.constant 0 : index
    %c0_43 = arith.constant 0 : index
    %56 = vector.load %arg2[%c4, %c0_42, %c0_43] : memref<7x1x128xf32, #tpu.memory_space<vmem>>, vector<1x1x128xf32>
    %57 = vector.shape_cast %56 : vector<1x1x128xf32> to vector<1x128xf32>
    %58 = vector.broadcast %57 : vector<1x128xf32> to vector<16x128xf32>
    %59 = arith.addf %55, %58 : vector<16x128xf32>
    %cst_44 = arith.constant 0.000000e+00 : f32
    %60 = vector.broadcast %cst_44 : f32 to vector<16x128xf32>
    %61 = arith.maximumf %59, %60 : vector<16x128xf32>
    %62 = arith.truncf %61 : vector<16x128xf32> to vector<16x128xbf16>
    %c2_45 = arith.constant 2 : index
    %c0_46 = arith.constant 0 : index
    %c0_47 = arith.constant 0 : index
    %63 = vector.load %arg5[%c2_45, %c0_46, %c0_47] : memref<4x128x128xbf16, #tpu.memory_space<vmem>>, vector<1x128x128xbf16>
    %64 = vector.shape_cast %63 : vector<1x128x128xbf16> to vector<128x128xbf16>
    %cst_48 = arith.constant dense<0.000000e+00> : vector<16x128xf32>
    %65 = tpu.matmul %62, %64, %cst_48 {dimension_numbers = #tpu.dot_dimension_numbers<[1], [0], [0], [1], [0, 0, 1, 1], [], []>} : vector<16x128xbf16>, vector<128x128xbf16>, vector<16x128xf32> -> vector<16x128xf32>
    %c0_49 = arith.constant 0 : index
    %c640 = arith.constant 640 : index
    %66 = vector.load %arg7[%c0_49, %c640] : memref<16x896xbf16, #tpu.memory_space<vmem>>, vector<16x128xbf16>
    tpu.vector_store %arg7[%c0_49, %c640], %62 {strides = array<i32>} : memref<16x896xbf16, #tpu.memory_space<vmem>>, vector<16x128xbf16>,
    %67 = vector.extract_strided_slice %54 {offsets = [0, 128], sizes = [16, 128], strides = [1, 1]} : vector<16x256xf32> to vector<16x128xf32>
    %68 = arith.addf %67, %65 : vector<16x128xf32>
    %c5 = arith.constant 5 : index
    %c0_50 = arith.constant 0 : index
    %c0_51 = arith.constant 0 : index
    %69 = vector.load %arg2[%c5, %c0_50, %c0_51] : memref<7x1x128xf32, #tpu.memory_space<vmem>>, vector<1x1x128xf32>
    %70 = vector.shape_cast %69 : vector<1x1x128xf32> to vector<1x128xf32>
    %71 = vector.broadcast %70 : vector<1x128xf32> to vector<16x128xf32>
    %72 = arith.addf %68, %71 : vector<16x128xf32>
    %cst_52 = arith.constant 0.000000e+00 : f32
    %73 = vector.broadcast %cst_52 : f32 to vector<16x128xf32>
    %74 = arith.maximumf %72, %73 : vector<16x128xf32>
    %75 = arith.truncf %74 : vector<16x128xf32> to vector<16x128xbf16>
    %c0_53 = arith.constant 0 : index
    %c768 = arith.constant 768 : index
    %76 = vector.load %arg7[%c0_53, %c768] : memref<16x896xbf16, #tpu.memory_space<vmem>>, vector<16x128xbf16>
    tpu.vector_store %arg7[%c0_53, %c768], %75 {strides = array<i32>} : memref<16x896xbf16, #tpu.memory_space<vmem>>, vector<16x128xbf16>,
    %c0_54 = arith.constant 0 : index
    %c0_55 = arith.constant 0 : index
    %77 = vector.load %arg7[%c0_54, %c0_55] : memref<16x896xbf16, #tpu.memory_space<vmem>>, vector<16x896xbf16>
    %c1152 = arith.constant 1152 : index
    %c0_56 = arith.constant 0 : index
    %78 = vector.load %arg4[%c1152, %c0_56] : memref<2048x256xbf16, #tpu.memory_space<vmem>>, vector<896x256xbf16>
    %cst_57 = arith.constant dense<0.000000e+00> : vector<16x256xf32>
    %79 = tpu.matmul %77, %78, %cst_57 {dimension_numbers = #tpu.dot_dimension_numbers<[1], [0], [0], [1], [0, 0, 1, 1], [], []>} : vector<16x896xbf16>, vector<896x256xbf16>, vector<16x256xf32> -> vector<16x256xf32>
    %80 = vector.extract_strided_slice %79 {offsets = [0, 0], sizes = [16, 128], strides = [1, 1]} : vector<16x256xf32> to vector<16x128xf32>
    %c6 = arith.constant 6 : index
    %c0_58 = arith.constant 0 : index
    %c0_59 = arith.constant 0 : index
    %81 = vector.load %arg2[%c6, %c0_58, %c0_59] : memref<7x1x128xf32, #tpu.memory_space<vmem>>, vector<1x1x128xf32>
    %82 = vector.shape_cast %81 : vector<1x1x128xf32> to vector<1x128xf32>
    %83 = vector.broadcast %82 : vector<1x128xf32> to vector<16x128xf32>
    %84 = arith.addf %80, %83 : vector<16x128xf32>
    %cst_60 = arith.constant 0.000000e+00 : f32
    %85 = vector.broadcast %cst_60 : f32 to vector<16x128xf32>
    %86 = arith.maximumf %84, %85 : vector<16x128xf32>
    %87 = arith.truncf %86 : vector<16x128xf32> to vector<16x128xbf16>
    %c3_61 = arith.constant 3 : index
    %c0_62 = arith.constant 0 : index
    %c0_63 = arith.constant 0 : index
    %88 = vector.load %arg5[%c3_61, %c0_62, %c0_63] : memref<4x128x128xbf16, #tpu.memory_space<vmem>>, vector<1x128x128xbf16>
    %89 = vector.shape_cast %88 : vector<1x128x128xbf16> to vector<128x128xbf16>
    %cst_64 = arith.constant dense<0.000000e+00> : vector<16x128xf32>
    %90 = tpu.matmul %87, %89, %cst_64 {dimension_numbers = #tpu.dot_dimension_numbers<[1], [0], [0], [1], [0, 0, 1, 1], [], []>} : vector<16x128xbf16>, vector<128x128xbf16>, vector<16x128xf32> -> vector<16x128xf32>
    %91 = vector.extract_strided_slice %79 {offsets = [0, 128], sizes = [16, 128], strides = [1, 1]} : vector<16x256xf32> to vector<16x128xf32>
    %92 = arith.addf %91, %90 : vector<16x128xf32>
    %c0_65 = arith.constant 0 : index
    %c0_66 = arith.constant 0 : index
    %93 = vector.load %arg3[%c0_65, %c0_66] : memref<1x128xf32, #tpu.memory_space<vmem>>, vector<1x128xf32>
    %94 = vector.broadcast %93 : vector<1x128xf32> to vector<16x128xf32>
    %95 = arith.addf %92, %94 : vector<16x128xf32>
    %c0_67 = arith.constant 0 : index
    %c0_68 = arith.constant 0 : index
    %96 = vector.load %arg6[%c0_67, %c0_68] : memref<16x128xf32, #tpu.memory_space<vmem>>, vector<16x128xf32>
    tpu.vector_store %arg6[%c0_67, %c0_68], %95 {strides = array<i32>} : memref<16x128xf32, #tpu.memory_space<vmem>>, vector<16x128xf32>,
    return
  }
  func.func @transform_0(%arg0: i32) -> (i32, i32) {
    %c0_i32 = arith.constant 0 : i32
    %c0_i32_0 = arith.constant 0 : i32
    return %arg0, %c0_i32 : i32, i32
  }
  func.func @transform_1(%arg0: i32) -> (i32, i32, i32) {
    %c0_i32 = arith.constant 0 : i32
    %c0_i32_0 = arith.constant 0 : i32
    %c0_i32_1 = arith.constant 0 : i32
    %c0_i32_2 = arith.constant 0 : i32
    return %c0_i32, %c0_i32_0, %c0_i32_1 : i32, i32, i32
  }
  func.func @transform_2(%arg0: i32) -> (i32, i32) {
    %c0_i32 = arith.constant 0 : i32
    %c0_i32_0 = arith.constant 0 : i32
    %c0_i32_1 = arith.constant 0 : i32
    return %c0_i32, %c0_i32_0 : i32, i32
  }
  func.func @transform_3(%arg0: i32) -> (i32, i32) {
    %c0_i32 = arith.constant 0 : i32
    %c0_i32_0 = arith.constant 0 : i32
    %c0_i32_1 = arith.constant 0 : i32
    return %c0_i32, %c0_i32_0 : i32, i32
  }
  func.func @transform_4(%arg0: i32) -> (i32, i32, i32) {
    %c0_i32 = arith.constant 0 : i32
    %c0_i32_0 = arith.constant 0 : i32
    %c0_i32_1 = arith.constant 0 : i32
    %c0_i32_2 = arith.constant 0 : i32
    return %c0_i32, %c0_i32_0, %c0_i32_1 : i32, i32, i32
  }
  func.func @transform_5(%arg0: i32) -> (i32, i32) {
    %c0_i32 = arith.constant 0 : i32
    %c0_i32_0 = arith.constant 0 : i32
    return %arg0, %c0_i32 : i32, i32
  }
}

</mosaic_0001>

<llo_original>
// kernel: dense_skip_forward.1
$region0: #{dense_skip_forward.1}
  #allocation0 [shape = 'u32[]', space=smem, size = 0x4, offset = 0x4, fixed_abs, tag = 'smem constant byte address 0x4 - core index']
  #allocation1 [shape = 'u32[144,128]{1,0:T(1,128)}', space=vmem, size = 0x12000, scoped, tag = 'internal scratch']
  #allocation2 [shape = 'bf16[16,896]{1,0:T(16,128)(2,1)}', space=vmem, size = 0x7000, scoped, tag = 'scratch operand']
  %s0 = inlined_call_operand.vmem [shape: bf16[16,128], index: 0, kind: input, shape index: {}]
  %s1 = inlined_call_operand.vmem [shape: f32[7,1,128], index: 1, kind: input, shape index: {}]
  %s2 = inlined_call_operand.vmem [shape: f32[1,128], index: 2, kind: input, shape index: {}]
  %s3 = inlined_call_operand.hbm [shape: bf16[2048,256], index: 3, kind: input, shape index: {}]
  %s4 = inlined_call_operand.hbm [shape: bf16[4,128,128], index: 4, kind: input, shape index: {}]
  %s5 = inlined_call_operand.vmem [shape: f32[16,128], index: 5, kind: output, shape index: {}]
  %s6 = sld [smem:[#allocation0]]
  $region38: #{dense_skip_forward.1} parent=0
    _
  %s8 = ssub.s32 1, %s6
  %s9 = scalar_select 0, %s8, %s6
  $region1: #{dense_skip_forward.1} parent=0
    #allocation3 [shape = 'u8[1048576]{0}', space=vmem, size = 0x100000, scoped, tag = 'input window, operand 3, single buffered']
    #allocation4 [shape = 's32[1]{0}', space=sflag, size = 0x4, scoped, tag = 'scoped memory for dense_skip_forward.1']
    #allocation5 [shape = 'u8[131072]{0}', space=vmem, size = 0x20000, scoped, tag = 'input window, operand 4, single buffered']
    #allocation6 [shape = 's32[1]{0}', space=sflag, size = 0x4, scoped, tag = 'scoped memory for dense_skip_forward.1']
    %10 = vsyncpa [#allocation4], 0
    %11 = vsyncpa [#allocation6], 0
    // Predicated region
    $region2: #{dense_skip_forward.1} parent=1 // pred_check
      _
    $region3: #{dense_skip_forward.1} parent=1 // pred_check_branch
      %13 = sbr.rel (0) target = $region5
    $region4: #{dense_skip_forward.1} parent=1 // pred_region
      _
    $region5: #{dense_skip_forward.1} parent=1 // pred_fallthru
      _
    // Predicated region
    $region6: #{dense_skip_forward.1} parent=1 // pred_check
      _
    $region7: #{dense_skip_forward.1} parent=1 // pred_check_branch
      %15 = sbr.rel (0) target = $region9
    $region8: #{dense_skip_forward.1} parent=1 // pred_region
      _
    $region9: #{dense_skip_forward.1} parent=1 // pred_fallthru
      _
    // Predicated region
    $region10: #{dense_skip_forward.1} parent=1 // pred_check
      _
    $region11: #{dense_skip_forward.1} parent=1 // pred_check_branch
      %17 = sbr.rel (0) target = $region13
    $region12: #{dense_skip_forward.1} parent=1 // pred_region
      _
    $region13: #{dense_skip_forward.1} parent=1 // pred_fallthru
      _
    // Predicated region
    $region14: #{dense_skip_forward.1} parent=1 // pred_check
      _
    $region15: #{dense_skip_forward.1} parent=1 // pred_check_branch
      %19 = sbr.rel (0) target = $region17
    $region16: #{dense_skip_forward.1} parent=1 // pred_region
      %s21 = ssub.s32 32768, 32768
      %22 = vsyncadd [#allocation4], %s21
      %s23 = sshll.u32 [#allocation3], 4
      %s24 = int_to_ptr.vmem [resolvable:$true] %s23
      %29 = dma.hbm_to_vmem [thread:$0]  %s3, 32768, %s24, [#allocation4], 128, 128, 8
    $region17: #{dense_skip_forward.1} parent=1 // pred_fallthru
      _
    // Predicated region
    $region18: #{dense_skip_forward.1} parent=1 // pred_check
      _
    $region19: #{dense_skip_forward.1} parent=1 // pred_check_branch
      %31 = sbr.rel (0) target = $region21
    $region20: #{dense_skip_forward.1} parent=1 // pred_region
      %s33 = ssub.s32 4096, 4096
      %34 = vsyncadd [#allocation6], %s33
      %s35 = sshll.u32 [#allocation5], 4
      %s36 = int_to_ptr.vmem [resolvable:$true] %s35
      %41 = dma.hbm_to_vmem [thread:$0]  %s4, 4096, %s36, [#allocation6], 64, 64, 4
    $region21: #{dense_skip_forward.1} parent=1 // pred_fallthru
      _
    // Predicated region
    $region22: #{dense_skip_forward.1} parent=1 // pred_check
      _
    $region23: #{dense_skip_forward.1} parent=1 // pred_check_branch
      %43 = sbr.rel (0) target = $region25
    $region24: #{dense_skip_forward.1} parent=1 // pred_region
      %44 = dma.done [#allocation4], 32768
    $region25: #{dense_skip_forward.1} parent=1 // pred_fallthru
      _
    // Predicated region
    $region26: #{dense_skip_forward.1} parent=1 // pred_check
      _
    $region27: #{dense_skip_forward.1} parent=1 // pred_check_branch
      %46 = sbr.rel (0) target = $region29
    $region28: #{dense_skip_forward.1} parent=1 // pred_region
      %47 = dma.done [#allocation6], 4096
    $region29: #{dense_skip_forward.1} parent=1 // pred_fallthru
      _
    %v49 = vld [vmem:[%s0] sm:$0xf]
    %v50 = vld [vmem:[%s0 + $0x4] sm:$0xf]
    %v53 = vunpack.c.l.b16 %v49
    %v54 = vunpack.c.l.b16 %v50
    %v55 = vpack.c.b16 %v54, %v53
    %57 = vst [vmem:[#allocation2] sm:$0xff] %v55
    %v58 = vld [vmem:[#allocation2] sm:$0xff]
    %v59 = vld [vmem:[#allocation3] sm:$0xff]
    %v60 = vld [vmem:[#allocation3 + $0x8] sm:$0xff]
    %v61 = vld [vmem:[#allocation3 + $0x10] sm:$0xff]
    %v62 = vld [vmem:[#allocation3 + $0x18] sm:$0xff]
    %v63 = vld [vmem:[#allocation3 + $0x20] sm:$0xff]
    %v64 = vld [vmem:[#allocation3 + $0x28] sm:$0xff]
    %v65 = vld [vmem:[#allocation3 + $0x30] sm:$0xff]
    %v66 = vld [vmem:[#allocation3 + $0x38] sm:$0xff]
    %v67 = vld [vmem:[#allocation3 + $0x40] sm:$0xff]
    %v68 = vld [vmem:[#allocation3 + $0x48] sm:$0xff]
    %v69 = vld [vmem:[#allocation3 + $0x50] sm:$0xff]
    %v70 = vld [vmem:[#allocation3 + $0x58] sm:$0xff]
    %v71 = vld [vmem:[#allocation3 + $0x60] sm:$0xff]
    %v72 = vld [vmem:[#allocation3 + $0x68] sm:$0xff]
    %v73 = vld [vmem:[#allocation3 + $0x70] sm:$0xff]
    %v74 = vld [vmem:[#allocation3 + $0x78] sm:$0xff]
    %v91 = vunpack.c.l.b16 %v59
    %v92 = vunpack.c.h.b16 %v59
    %v93 = vunpack.c.l.b16 %v60
    %v94 = vunpack.c.h.b16 %v60
    %v95 = vunpack.c.l.b16 %v61
    %v96 = vunpack.c.h.b16 %v61
    %v97 = vunpack.c.l.b16 %v62
    %v98 = vunpack.c.h.b16 %v62
    %v99 = vunpack.c.l.b16 %v63
    %v100 = vunpack.c.h.b16 %v63
    %v101 = vunpack.c.l.b16 %v64
    %v102 = vunpack.c.h.b16 %v64
    %v103 = vunpack.c.l.b16 %v65
    %v104 = vunpack.c.h.b16 %v65
    %v105 = vunpack.c.l.b16 %v66
    %v106 = vunpack.c.h.b16 %v66
    %v107 = vunpack.c.l.b16 %v67
    %v108 = vunpack.c.h.b16 %v67
    %v109 = vunpack.c.l.b16 %v68
    %v110 = vunpack.c.h.b16 %v68
    %v111 = vunpack.c.l.b16 %v69
    %v112 = vunpack.c.h.b16 %v69
    %v113 = vunpack.c.l.b16 %v70
    %v114 = vunpack.c.h.b16 %v70
    %v115 = vunpack.c.l.b16 %v71
    %v116 = vunpack.c.h.b16 %v71
    %v117 = vunpack.c.l.b16 %v72
    %v118 = vunpack.c.h.b16 %v72
    %v119 = vunpack.c.l.b16 %v73
    %v120 = vunpack.c.h.b16 %v73
    %v121 = vunpack.c.l.b16 %v74
    %v122 = vunpack.c.h.b16 %v74
    %v123 = vpack.c.b16 %v93, %v91
    %v124 = vpack.c.b16 %v94, %v92
    %v125 = vpack.c.b16 %v97, %v95
    %v126 = vpack.c.b16 %v98, %v96
    %v127 = vpack.c.b16 %v101, %v99
    %v128 = vpack.c.b16 %v102, %v100
    %v129 = vpack.c.b16 %v105, %v103
    %v130 = vpack.c.b16 %v106, %v104
    %v131 = vpack.c.b16 %v109, %v107
    %v132 = vpack.c.b16 %v110, %v108
    %v133 = vpack.c.b16 %v113, %v111
    %v134 = vpack.c.b16 %v114, %v112
    %v135 = vpack.c.b16 %v117, %v115
    %v136 = vpack.c.b16 %v118, %v116
    %v137 = vpack.c.b16 %v121, %v119
    %v138 = vpack.c.b16 %v122, %v120
    %155 = vmatprep.subr.bf16.mxu0 %v124
    %156 = vmatpush1.bf16.msra.mxu0 %v123
    %157 = vmatprep.subr.bf16.mxu0 %v126
    %158 = vmatpush1.bf16.msra.mxu0 %v125
    %159 = vmatprep.subr.bf16.mxu0 %v128
    %160 = vmatpush1.bf16.msra.mxu0 %v127
    %161 = vmatprep.subr.bf16.mxu0 %v130
    %162 = vmatpush1.bf16.msra.mxu0 %v129
    %163 = vmatprep.subr.bf16.mxu0 %v132
    %164 = vmatpush1.bf16.msra.mxu0 %v131
    %165 = vmatprep.subr.bf16.mxu0 %v134
    %166 = vmatpush1.bf16.msra.mxu0 %v133
    %167 = vmatprep.subr.bf16.mxu0 %v136
    %168 = vmatpush1.bf16.msra.mxu0 %v135
    %169 = vmatprep.subr.bf16.mxu0 %v138
    %170 = vmatpush1.bf16.msra.mxu0 %v137
    %171 = vmatprep.subr.bf16.mxu0 0
    %172 = vmatpush1.bf16.msra.mxu0 0
    %173 = vmatprep.subr.bf16.mxu0 0
    %174 = vmatpush1.bf16.msra.mxu0 0
    %175 = vmatprep.subr.bf16.mxu0 0
    %176 = vmatpush1.bf16.msra.mxu0 0
    %177 = vmatprep.subr.bf16.mxu0 0
    %178 = vmatpush1.bf16.msra.mxu0 0
    %179 = vmatprep.subr.bf16.mxu0 0
    %180 = vmatpush1.bf16.msra.mxu0 0
    %181 = vmatprep.subr.bf16.mxu0 0
    %182 = vmatpush1.bf16.msra.mxu0 0
    %183 = vmatprep.subr.bf16.mxu0 0
    %184 = vmatpush1.bf16.msra.mxu0 0
    %185 = vmatprep.subr.bf16.mxu0 0
    %186 = vmatpush1.bf16.msra.mxu0 0
    %187 = vmatprep.mubr.bf16.mxu0 0
    %188 = vmatmul.mubr.bf16.gmra.mrb[0].mxu0 %v58
    %v189 = vpop.f32.mrb[0].mxu0
    %v190 = vadd.f32 0.0, %v189
    %v191 = vpop.f32.mrb[0].mxu0
    %v192 = vadd.f32 0.0, %v191
    %v193 = vpop.f32.mrb[0].mxu0
    %v194 = vadd.f32 0.0, %v193
    %v195 = vpop.f32.mrb[0].mxu0
    %v196 = vadd.f32 0.0, %v195
    %197 = vdwg.mxu0
    %v198 = vld [vmem:[%s1] sm:$0x1]
    %v200 = vlaneseq
    %v201 = vshrl.u32 %v200, 7
    %v202 = vsub.s32 0, %v201
    %v203 = vrot.slane %v198, %v202
    %v205 = vadd.f32 %v190, %v203
    %v206 = vadd.f32 %v194, %v203
    %v207 = vmax.f32 %v205, 0.0
    %v208 = vmax.f32 %v206, 0.0
    %v209 = vpack.c.bf16 %v208, %v207
    %v210 = vld [vmem:[#allocation5] sm:$0xf]
    %v211 = vld [vmem:[#allocation5 + $0x4] sm:$0xf]
    %v212 = vld [vmem:[#allocation5 + $0x8] sm:$0xf]
    %v213 = vld [vmem:[#allocation5 + $0xc] sm:$0xf]
    %v214 = vld [vmem:[#allocation5 + $0x10] sm:$0xf]
    %v215 = vld [vmem:[#allocation5 + $0x14] sm:$0xf]
    %v216 = vld [vmem:[#allocation5 + $0x18] sm:$0xf]
    %v217 = vld [vmem:[#allocation5 + $0x1c] sm:$0xf]
    %v218 = vld [vmem:[#allocation5 + $0x20] sm:$0xf]
    %v219 = vld [vmem:[#allocation5 + $0x24] sm:$0xf]
    %v220 = vld [vmem:[#allocation5 + $0x28] sm:$0xf]
    %v221 = vld [vmem:[#allocation5 + $0x2c] sm:$0xf]
    %v222 = vld [vmem:[#allocation5 + $0x30] sm:$0xf]
    %v223 = vld [vmem:[#allocation5 + $0x34] sm:$0xf]
    %v224 = vld [vmem:[#allocation5 + $0x38] sm:$0xf]
    %v225 = vld [vmem:[#allocation5 + $0x3c] sm:$0xf]
    %v242 = vunpack.c.l.b16 %v210
    %v243 = vunpack.c.l.b16 %v211
    %v244 = vunpack.c.l.b16 %v212
    %v245 = vunpack.c.l.b16 %v213
    %v246 = vunpack.c.l.b16 %v214
    %v247 = vunpack.c.l.b16 %v215
    %v248 = vunpack.c.l.b16 %v216
    %v249 = vunpack.c.l.b16 %v217
    %v250 = vunpack.c.l.b16 %v218
    %v251 = vunpack.c.l.b16 %v219
    %v252 = vunpack.c.l.b16 %v220
    %v253 = vunpack.c.l.b16 %v221
    %v254 = vunpack.c.l.b16 %v222
    %v255 = vunpack.c.l.b16 %v223
    %v256 = vunpack.c.l.b16 %v224
    %v257 = vunpack.c.l.b16 %v225
    %v258 = vpack.c.b16 %v243, %v242
    %v259 = vpack.c.b16 %v245, %v244
    %v260 = vpack.c.b16 %v247, %v246
    %v261 = vpack.c.b16 %v249, %v248
    %v262 = vpack.c.b16 %v251, %v250
    %v263 = vpack.c.b16 %v253, %v252
    %v264 = vpack.c.b16 %v255, %v254
    %v265 = vpack.c.b16 %v257, %v256
    %274 = vmatprep.subr.bf16.mxu0 0
    %275 = vmatpush1.bf16.msra.mxu0 %v258
    %276 = vmatprep.subr.bf16.mxu0 0
    %277 = vmatpush1.bf16.msra.mxu0 %v259
    %278 = vmatprep.subr.bf16.mxu0 0
    %279 = vmatpush1.bf16.msra.mxu0 %v260
    %280 = vmatprep.subr.bf16.mxu0 0
    %281 = vmatpush1.bf16.msra.mxu0 %v261
    %282 = vmatprep.subr.bf16.mxu0 0
    %283 = vmatpush1.bf16.msra.mxu0 %v262
    %284 = vmatprep.subr.bf16.mxu0 0
    %285 = vmatpush1.bf16.msra.mxu0 %v263
    %286 = vmatprep.subr.bf16.mxu0 0
    %287 = vmatpush1.bf16.msra.mxu0 %v264
    %288 = vmatprep.subr.bf16.mxu0 0
    %289 = vmatpush1.bf16.msra.mxu0 %v265
    %290 = vmatprep.subr.bf16.mxu0 0
    %291 = vmatpush1.bf16.msra.mxu0 0
    %292 = vmatprep.subr.bf16.mxu0 0
    %293 = vmatpush1.bf16.msra.mxu0 0
    %294 = vmatprep.subr.bf16.mxu0 0
    %295 = vmatpush1.bf16.msra.mxu0 0
    %296 = vmatprep.subr.bf16.mxu0 0
    %297 = vmatpush1.bf16.msra.mxu0 0
    %298 = vmatprep.subr.bf16.mxu0 0
    %299 = vmatpush1.bf16.msra.mxu0 0
    %300 = vmatprep.subr.bf16.mxu0 0
    %301 = vmatpush1.bf16.msra.mxu0 0
    %302 = vmatprep.subr.bf16.mxu0 0
    %303 = vmatpush1.bf16.msra.mxu0 0
    %304 = vmatprep.subr.bf16.mxu0 0
    %305 = vmatpush1.bf16.msra.mxu0 0
    %306 = vmatprep.mubr.bf16.mxu0 0
    %307 = vmatmul.mubr.bf16.gmra.mrb[0].mxu0 %v209
    %v308 = vpop.f32.mrb[0].mxu0
    %v309 = vadd.f32 0.0, %v308
    %v310 = vpop.f32.mrb[0].mxu0
    %v311 = vpop.f32.mrb[0].mxu0
    %v312 = vadd.f32 0.0, %v311
    %v313 = vpop.f32.mrb[0].mxu0
    %314 = vdwg.mxu0
    %315 = vst [vmem:[#allocation2 + $0x8] sm:$0xff] %v209
    %v316 = vadd.f32 %v192, %v309
    %v317 = vadd.f32 %v196, %v312
    %s318 = scalar_lea.vmem %s1, 1
    %v319 = vld [vmem:[%s318] sm:$0x1]
    %v321 = vlaneseq
    %v322 = vshrl.u32 %v321, 7
    %v323 = vsub.s32 0, %v322
    %v324 = vrot.slane %v319, %v323
    %v326 = vadd.f32 %v316, %v324
    %v327 = vadd.f32 %v317, %v324
    %v328 = vmax.f32 %v326, 0.0
    %v329 = vmax.f32 %v327, 0.0
    %v330 = vpack.c.bf16 %v329, %v328
    %331 = vst [vmem:[#allocation2 + $0x10] sm:$0xff] %v330
    %v332 = vld [vmem:[#allocation2] sm:$0xff]
    %v333 = vld [vmem:[#allocation2 + $0x8] sm:$0xff]
    %v334 = vld [vmem:[#allocation2 + $0x10] sm:$0xff]
    %v335 = vld [vmem:[#allocation3 + $0x80] sm:$0xff]
    %v336 = vld [vmem:[#allocation3 + $0x88] sm:$0xff]
    %v337 = vld [vmem:[#allocation3 + $0x90] sm:$0xff]
    %v338 = vld [vmem:[#allocation3 + $0x98] sm:$0xff]
    %v339 = vld [vmem:[#allocation3 + $0xa0] sm:$0xff]
    %v340 = vld [vmem:[#allocation3 + $0xa8] sm:$0xff]
    %v341 = vld [vmem:[#allocation3 + $0xb0] sm:$0xff]
    %v342 = vld [vmem:[#allocation3 + $0xb8] sm:$0xff]
    %v343 = vld [vmem:[#allocation3 + $0xc0] sm:$0xff]
    %v344 = vld [vmem:[#allocation3 + $0xc8] sm:$0xff]
    %v345 = vld [vmem:[#allocation3 + $0xd0] sm:$0xff]
    %v346 = vld [vmem:[#allocation3 + $0xd8] sm:$0xff]
    %v347 = vld [vmem:[#allocation3 + $0xe0] sm:$0xff]
    %v348 = vld [vmem:[#allocation3 + $0xe8] sm:$0xff]
    %v349 = vld [vmem:[#allocation3 + $0xf0] sm:$0xff]
    %v350 = vld [vmem:[#allocation3 + $0xf8] sm:$0xff]
    %v351 = vld [vmem:[#allocation3 + $0x100] sm:$0xff]
    %v352 = vld [vmem:[#allocation3 + $0x108] sm:$0xff]
    %v353 = vld [vmem:[#allocation3 + $0x110] sm:$0xff]
    %v354 = vld [vmem:[#allocation3 + $0x118] sm:$0xff]
    %v355 = vld [vmem:[#allocation3 + $0x120] sm:$0xff]
    %v356 = vld [vmem:[#allocation3 + $0x128] sm:$0xff]
    %v357 = vld [vmem:[#allocation3 + $0x130] sm:$0xff]
    %v358 = vld [vmem:[#allocation3 + $0x138] sm:$0xff]
    %v359 = vld [vmem:[#allocation3 + $0x140] sm:$0xff]
    %v360 = vld [vmem:[#allocation3 + $0x148] sm:$0xff]
    %v361 = vld [vmem:[#allocation3 + $0x150] sm:$0xff]
    %v362 = vld [vmem:[#allocation3 + $0x158] sm:$0xff]
    %v363 = vld [vmem:[#allocation3 + $0x160] sm:$0xff]
    %v364 = vld [vmem:[#allocation3 + $0x168] sm:$0xff]
    %v365 = vld [vmem:[#allocation3 + $0x170] sm:$0xff]
    %v366 = vld [vmem:[#allocation3 + $0x178] sm:$0xff]
    %v367 = vld [vmem:[#allocation3 + $0x180] sm:$0xff]
    %v368 = vld [vmem:[#allocation3 + $0x188] sm:$0xff]
    %v369 = vld [vmem:[#allocation3 + $0x190] sm:$0xff]
    %v370 = vld [vmem:[#allocation3 + $0x198] sm:$0xff]
    %v371 = vld [vmem:[#allocation3 + $0x1a0] sm:$0xff]
    %v372 = vld [vmem:[#allocation3 + $0x1a8] sm:$0xff]
    %v373 = vld [vmem:[#allocation3 + $0x1b0] sm:$0xff]
    %v374 = vld [vmem:[#allocation3 + $0x1b8] sm:$0xff]
    %v375 = vld [vmem:[#allocation3 + $0x1c0] sm:$0xff]
    %v376 = vld [vmem:[#allocation3 + $0x1c8] sm:$0xff]
    %v377 = vld [vmem:[#allocation3 + $0x1d0] sm:$0xff]
    %v378 = vld [vmem:[#allocation3 + $0x1d8] sm:$0xff]
    %v379 = vld [vmem:[#allocation3 + $0x1e0] sm:$0xff]
    %v380 = vld [vmem:[#allocation3 + $0x1e8] sm:$0xff]
    %v381 = vld [vmem:[#allocation3 + $0x1f0] sm:$0xff]
    %v382 = vld [vmem:[#allocation3 + $0x1f8] sm:$0xff]
    %v431 = vunpack.c.l.b16 %v335
    %v432 = vunpack.c.h.b16 %v335
    %v433 = vunpack.c.l.b16 %v336
    %v434 = vunpack.c.h.b16 %v336
    %v435 = vunpack.c.l.b16 %v337
    %v436 = vunpack.c.h.b16 %v337
    %v437 = vunpack.c.l.b16 %v338
    %v438 = vunpack.c.h.b16 %v338
    %v439 = vunpack.c.l.b16 %v339
    %v440 = vunpack.c.h.b16 %v339
    %v441 = vunpack.c.l.b16 %v340
    %v442 = vunpack.c.h.b16 %v340
    %v443 = vunpack.c.l.b16 %v341
    %v444 = vunpack.c.h.b16 %v341
    %v445 = vunpack.c.l.b16 %v342
    %v446 = vunpack.c.h.b16 %v342
    %v447 = vunpack.c.l.b16 %v343
    %v448 = vunpack.c.h.b16 %v343
    %v449 = vunpack.c.l.b16 %v344
    %v450 = vunpack.c.h.b16 %v344
    %v451 = vunpack.c.l.b16 %v345
    %v452 = vunpack.c.h.b16 %v345
    %v453 = vunpack.c.l.b16 %v346
    %v454 = vunpack.c.h.b16 %v346
    %v455 = vunpack.c.l.b16 %v347
    %v456 = vunpack.c.h.b16 %v347
    %v457 = vunpack.c.l.b16 %v348
    %v458 = vunpack.c.h.b16 %v348
    %v459 = vunpack.c.l.b16 %v349
    %v460 = vunpack.c.h.b16 %v349
    %v461 = vunpack.c.l.b16 %v350
    %v462 = vunpack.c.h.b16 %v350
    %v463 = vunpack.c.l.b16 %v351
    %v464 = vunpack.c.h.b16 %v351
    %v465 = vunpack.c.l.b16 %v352
    %v466 = vunpack.c.h.b16 %v352
    %v467 = vunpack.c.l.b16 %v353
    %v468 = vunpack.c.h.b16 %v353
    %v469 = vunpack.c.l.b16 %v354
    %v470 = vunpack.c.h.b16 %v354
    %v471 = vunpack.c.l.b16 %v355
    %v472 = vunpack.c.h.b16 %v355
    %v473 = vunpack.c.l.b16 %v356
    %v474 = vunpack.c.h.b16 %v356
    %v475 = vunpack.c.l.b16 %v357
    %v476 = vunpack.c.h.b16 %v357
    %v477 = vunpack.c.l.b16 %v358
    %v478 = vunpack.c.h.b16 %v358
    %v479 = vunpack.c.l.b16 %v359
    %v480 = vunpack.c.h.b16 %v359
    %v481 = vunpack.c.l.b16 %v360
    %v482 = vunpack.c.h.b16 %v360
    %v483 = vunpack.c.l.b16 %v361
    %v484 = vunpack.c.h.b16 %v361
    %v485 = vunpack.c.l.b16 %v362
    %v486 = vunpack.c.h.b16 %v362
    %v487 = vunpack.c.l.b16 %v363
    %v488 = vunpack.c.h.b16 %v363
    %v489 = vunpack.c.l.b16 %v364
    %v490 = vunpack.c.h.b16 %v364
    %v491 = vunpack.c.l.b16 %v365
    %v492 = vunpack.c.h.b16 %v365
    %v493 = vunpack.c.l.b16 %v366
    %v494 = vunpack.c.h.b16 %v366
    %v495 = vunpack.c.l.b16 %v367
    %v496 = vunpack.c.h.b16 %v367
    %v497 = vunpack.c.l.b16 %v368
    %v498 = vunpack.c.h.b16 %v368
    %v499 = vunpack.c.l.b16 %v369
    %v500 = vunpack.c.h.b16 %v369
    %v501 = vunpack.c.l.b16 %v370
    %v502 = vunpack.c.h.b16 %v370
    %v503 = vunpack.c.l.b16 %v371
    %v504 = vunpack.c.h.b16 %v371
    %v505 = vunpack.c.l.b16 %v372
    %v506 = vunpack.c.h.b16 %v372
    %v507 = vunpack.c.l.b16 %v373
    %v508 = vunpack.c.h.b16 %v373
    %v509 = vunpack.c.l.b16 %v374
    %v510 = vunpack.c.h.b16 %v374
    %v511 = vunpack.c.l.b16 %v375
    %v512 = vunpack.c.h.b16 %v375
    %v513 = vunpack.c.l.b16 %v376
    %v514 = vunpack.c.h.b16 %v376
    %v515 = vunpack.c.l.b16 %v377
    %v516 = vunpack.c.h.b16 %v377
    %v517 = vunpack.c.l.b16 %v378
    %v518 = vunpack.c.h.b16 %v378
    %v519 = vunpack.c.l.b16 %v379
    %v520 = vunpack.c.h.b16 %v379
    %v521 = vunpack.c.l.b16 %v380
    %v522 = vunpack.c.h.b16 %v380
    %v523 = vunpack.c.l.b16 %v381
    %v524 = vunpack.c.h.b16 %v381
    %v525 = vunpack.c.l.b16 %v382
    %v526 = vunpack.c.h.b16 %v382
    %v527 = vpack.c.b16 %v433, %v431
    %v528 = vpack.c.b16 %v434, %v432
    %v529 = vpack.c.b16 %v437, %v435
    %v530 = vpack.c.b16 %v438, %v436
    %v531 = vpack.c.b16 %v441, %v439
    %v532 = vpack.c.b16 %v442, %v440
    %v533 = vpack.c.b16 %v445, %v443
    %v534 = vpack.c.b16 %v446, %v444
    %v535 = vpack.c.b16 %v449, %v447
    %v536 = vpack.c.b16 %v450, %v448
    %v537 = vpack.c.b16 %v453, %v451
    %v538 = vpack.c.b16 %v454, %v452
    %v539 = vpack.c.b16 %v457, %v455
    %v540 = vpack.c.b16 %v458, %v456
    %v541 = vpack.c.b16 %v461, %v459
    %v542 = vpack.c.b16 %v462, %v460
    %v543 = vpack.c.b16 %v465, %v463
    %v544 = vpack.c.b16 %v466, %v464
    %v545 = vpack.c.b16 %v469, %v467
    %v546 = vpack.c.b16 %v470, %v468
    %v547 = vpack.c.b16 %v473, %v471
    %v548 = vpack.c.b16 %v474, %v472
    %v549 = vpack.c.b16 %v477, %v475
    %v550 = vpack.c.b16 %v478, %v476
    %v551 = vpack.c.b16 %v481, %v479
    %v552 = vpack.c.b16 %v482, %v480
    %v553 = vpack.c.b16 %v485, %v483
    %v554 = vpack.c.b16 %v486, %v484
    %v555 = vpack.c.b16 %v489, %v487
    %v556 = vpack.c.b16 %v490, %v488
    %v557 = vpack.c.b16 %v493, %v491
    %v558 = vpack.c.b16 %v494, %v492
    %v559 = vpack.c.b16 %v497, %v495
    %v560 = vpack.c.b16 %v498, %v496
    %v561 = vpack.c.b16 %v501, %v499
    %v562 = vpack.c.b16 %v502, %v500
    %v563 = vpack.c.b16 %v505, %v503
    %v564 = vpack.c.b16 %v506, %v504
    %v565 = vpack.c.b16 %v509, %v507
    %v566 = vpack.c.b16 %v510, %v508
    %v567 = vpack.c.b16 %v513, %v511
    %v568 = vpack.c.b16 %v514, %v512
    %v569 = vpack.c.b16 %v517, %v515
    %v570 = vpack.c.b16 %v518, %v516
    %v571 = vpack.c.b16 %v521, %v519
    %v572 = vpack.c.b16 %v522, %v520
    %v573 = vpack.c.b16 %v525, %v523
    %v574 = vpack.c.b16 %v526, %v524
    %623 = vmatprep.subr.bf16.mxu0 %v528
    %624 = vmatpush1.bf16.msra.mxu0 %v527
    %625 = vmatprep.subr.bf16.mxu0 %v530
    %626 = vmatpush1.bf16.msra.mxu0 %v529
    %627 = vmatprep.subr.bf16.mxu0 %v532
    %628 = vmatpush1.bf16.msra.mxu0 %v531
    %629 = vmatprep.subr.bf16.mxu0 %v534
    %630 = vmatpush1.bf16.msra.mxu0 %v533
    %631 = vmatprep.subr.bf16.mxu0 %v536
    %632 = vmatpush1.bf16.msra.mxu0 %v535
    %633 = vmatprep.subr.bf16.mxu0 %v538
    %634 = vmatpush1.bf16.msra.mxu0 %v537
    %635 = vmatprep.subr.bf16.mxu0 %v540
    %636 = vmatpush1.bf16.msra.mxu0 %v539
    %637 = vmatprep.subr.bf16.mxu0 %v542
    %638 = vmatpush1.bf16.msra.mxu0 %v541
    %639 = vmatprep.subr.bf16.mxu0 %v544
    %640 = vmatpush1.bf16.msra.mxu0 %v543
    %641 = vmatprep.subr.bf16.mxu0 %v546
    %642 = vmatpush1.bf16.msra.mxu0 %v545
    %643 = vmatprep.subr.bf16.mxu0 %v548
    %644 = vmatpush1.bf16.msra.mxu0 %v547
    %645 = vmatprep.subr.bf16.mxu0 %v550
    %646 = vmatpush1.bf16.msra.mxu0 %v549
    %647 = vmatprep.subr.bf16.mxu0 %v552
    %648 = vmatpush1.bf16.msra.mxu0 %v551
    %649 = vmatprep.subr.bf16.mxu0 %v554
    %650 = vmatpush1.bf16.msra.mxu0 %v553
    %651 = vmatprep.subr.bf16.mxu0 %v556
    %652 = vmatpush1.bf16.msra.mxu0 %v555
    %653 = vmatprep.subr.bf16.mxu0 %v558
    %654 = vmatpush1.bf16.msra.mxu0 %v557
    %655 = vmatprep.mubr.bf16.mxu0 %v333
    %656 = vmatmul.mubr.bf16.gmra.mrb[0].mxu0 %v332
    %v657 = vpop.f32.mrb[0].mxu0
    %v658 = vadd.f32 0.0, %v657
    %v659 = vpop.f32.mrb[0].mxu0
    %v660 = vadd.f32 0.0, %v659
    %v661 = vpop.f32.mrb[0].mxu0
    %v662 = vadd.f32 0.0, %v661
    %v663 = vpop.f32.mrb[0].mxu0
    %v664 = vadd.f32 0.0, %v663
    %665 = vdwg.mxu0
    %666 = vmatprep.subr.bf16.mxu0 %v560
    %667 = vmatpush1.bf16.msra.mxu0 %v559
    %668 = vmatprep.subr.bf16.mxu0 %v562
    %669 = vmatpush1.bf16.msra.mxu0 %v561
    %670 = vmatprep.subr.bf16.mxu0 %v564
    %671 = vmatpush1.bf16.msra.mxu0 %v563
    %672 = vmatprep.subr.bf16.mxu0 %v566
    %673 = vmatpush1.bf16.msra.mxu0 %v565
    %674 = vmatprep.subr.bf16.mxu0 %v568
    %675 = vmatpush1.bf16.msra.mxu0 %v567
    %676 = vmatprep.subr.bf16.mxu0 %v570
    %677 = vmatpush1.bf16.msra.mxu0 %v569
    %678 = vmatprep.subr.bf16.mxu0 %v572
    %679 = vmatpush1.bf16.msra.mxu0 %v571
    %680 = vmatprep.subr.bf16.mxu0 %v574
    %681 = vmatpush1.bf16.msra.mxu0 %v573
    %682 = vmatprep.subr.bf16.mxu0 0
    %683 = vmatpush1.bf16.msra.mxu0 0
    %684 = vmatprep.subr.bf16.mxu0 0
    %685 = vmatpush1.bf16.msra.mxu0 0
    %686 = vmatprep.subr.bf16.mxu0 0
    %687 = vmatpush1.bf16.msra.mxu0 0
    %688 = vmatprep.subr.bf16.mxu0 0
    %689 = vmatpush1.bf16.msra.mxu0 0
    %690 = vmatprep.subr.bf16.mxu0 0
    %691 = vmatpush1.bf16.msra.mxu0 0
    %692 = vmatprep.subr.bf16.mxu0 0
    %693 = vmatpush1.bf16.msra.mxu0 0
    %694 = vmatprep.subr.bf16.mxu0 0
    %695 = vmatpush1.bf16.msra.mxu0 0
    %696 = vmatprep.subr.bf16.mxu0 0
    %697 = vmatpush1.bf16.msra.mxu0 0
    %698 = vmatprep.mubr.bf16.mxu0 0
    %699 = vmatmul.mubr.bf16.gmra.mrb[0].mxu0 %v334
    %v700 = vpop.f32.mrb[0].mxu0
    %v701 = vadd.f32 %v658, %v700
    %v702 = vpop.f32.mrb[0].mxu0
    %v703 = vadd.f32 %v660, %v702
    %v704 = vpop.f32.mrb[0].mxu0
    %v705 = vadd.f32 %v662, %v704
    %v706 = vpop.f32.mrb[0].mxu0
    %v707 = vadd.f32 %v664, %v706
    %708 = vdwg.mxu0
    %s709 = scalar_lea.vmem %s1, 2
    %v710 = vld [vmem:[%s709] sm:$0x1]
    %v712 = vlaneseq
    %v713 = vshrl.u32 %v712, 7
    %v714 = vsub.s32 0, %v713
    %v715 = vrot.slane %v710, %v714
    %v717 = vadd.f32 %v701, %v715
    %v718 = vadd.f32 %v705, %v715
    %v719 = vmax.f32 %v717, 0.0
    %v720 = vmax.f32 %v718, 0.0
    %v721 = vpack.c.bf16 %v720, %v719
    %s722 = scalar_lea.vmem [#allocation5], 64
    %v723 = vld [vmem:[%s722] sm:$0xf]
    %v724 = vld [vmem:[%s722 + $0x4] sm:$0xf]
    %v725 = vld [vmem:[%s722 + $0x8] sm:$0xf]
    %v726 = vld [vmem:[%s722 + $0xc] sm:$0xf]
    %v727 = vld [vmem:[%s722 + $0x10] sm:$0xf]
    %v728 = vld [vmem:[%s722 + $0x14] sm:$0xf]
    %v729 = vld [vmem:[%s722 + $0x18] sm:$0xf]
    %v730 = vld [vmem:[%s722 + $0x1c] sm:$0xf]
    %v731 = vld [vmem:[%s722 + $0x20] sm:$0xf]
    %v732 = vld [vmem:[%s722 + $0x24] sm:$0xf]
    %v733 = vld [vmem:[%s722 + $0x28] sm:$0xf]
    %v734 = vld [vmem:[%s722 + $0x2c] sm:$0xf]
    %v735 = vld [vmem:[%s722 + $0x30] sm:$0xf]
    %v736 = vld [vmem:[%s722 + $0x34] sm:$0xf]
    %v737 = vld [vmem:[%s722 + $0x38] sm:$0xf]
    %v738 = vld [vmem:[%s722 + $0x3c] sm:$0xf]
    %v755 = vunpack.c.l.b16 %v723
    %v756 = vunpack.c.l.b16 %v724
    %v757 = vunpack.c.l.b16 %v725
    %v758 = vunpack.c.l.b16 %v726
    %v759 = vunpack.c.l.b16 %v727
    %v760 = vunpack.c.l.b16 %v728
    %v761 = vunpack.c.l.b16 %v729
    %v762 = vunpack.c.l.b16 %v730
    %v763 = vunpack.c.l.b16 %v731
    %v764 = vunpack.c.l.b16 %v732
    %v765 = vunpack.c.l.b16 %v733
    %v766 = vunpack.c.l.b16 %v734
    %v767 = vunpack.c.l.b16 %v735
    %v768 = vunpack.c.l.b16 %v736
    %v769 = vunpack.c.l.b16 %v737
    %v770 = vunpack.c.l.b16 %v738
    %v771 = vpack.c.b16 %v756, %v755
    %v772 = vpack.c.b16 %v758, %v757
    %v773 = vpack.c.b16 %v760, %v759
    %v774 = vpack.c.b16 %v762, %v761
    %v775 = vpack.c.b16 %v764, %v763
    %v776 = vpack.c.b16 %v766, %v765
    %v777 = vpack.c.b16 %v768, %v767
    %v778 = vpack.c.b16 %v770, %v769
    %787 = vmatprep.subr.bf16.mxu0 0
    %788 = vmatpush1.bf16.msra.mxu0 %v771
    %789 = vmatprep.subr.bf16.mxu0 0
    %790 = vmatpush1.bf16.msra.mxu0 %v772
    %791 = vmatprep.subr.bf16.mxu0 0
    %792 = vmatpush1.bf16.msra.mxu0 %v773
    %793 = vmatprep.subr.bf16.mxu0 0
    %794 = vmatpush1.bf16.msra.mxu0 %v774
    %795 = vmatprep.subr.bf16.mxu0 0
    %796 = vmatpush1.bf16.msra.mxu0 %v775
    %797 = vmatprep.subr.bf16.mxu0 0
    %798 = vmatpush1.bf16.msra.mxu0 %v776
    %799 = vmatprep.subr.bf16.mxu0 0
    %800 = vmatpush1.bf16.msra.mxu0 %v777
    %801 = vmatprep.subr.bf16.mxu0 0
    %802 = vmatpush1.bf16.msra.mxu0 %v778
    %803 = vmatprep.subr.bf16.mxu0 0
    %804 = vmatpush1.bf16.msra.mxu0 0
    %805 = vmatprep.subr.bf16.mxu0 0
    %806 = vmatpush1.bf16.msra.mxu0 0
    %807 = vmatprep.subr.bf16.mxu0 0
    %808 = vmatpush1.bf16.msra.mxu0 0
    %809 = vmatprep.subr.bf16.mxu0 0
    %810 = vmatpush1.bf16.msra.mxu0 0
    %811 = vmatprep.subr.bf16.mxu0 0
    %812 = vmatpush1.bf16.msra.mxu0 0
    %813 = vmatprep.subr.bf16.mxu0 0
    %814 = vmatpush1.bf16.msra.mxu0 0
    %815 = vmatprep.subr.bf16.mxu0 0
    %816 = vmatpush1.bf16.msra.mxu0 0
    %817 = vmatprep.subr.bf16.mxu0 0
    %818 = vmatpush1.bf16.msra.mxu0 0
    %819 = vmatprep.mubr.bf16.mxu0 0
    %820 = vmatmul.mubr.bf16.gmra.mrb[0].mxu0 %v721
    %v821 = vpop.f32.mrb[0].mxu0
    %v822 = vadd.f32 0.0, %v821
    %v823 = vpop.f32.mrb[0].mxu0
    %v824 = vpop.f32.mrb[0].mxu0
    %v825 = vadd.f32 0.0, %v824
    %v826 = vpop.f32.mrb[0].mxu0
    %827 = vdwg.mxu0
    %828 = vst [vmem:[#allocation2 + $0x18] sm:$0xff] %v721
    %v829 = vadd.f32 %v703, %v822
    %v830 = vadd.f32 %v707, %v825
    %s831 = scalar_lea.vmem %s1, 3
    %v832 = vld [vmem:[%s831] sm:$0x1]
    %v834 = vlaneseq
    %v835 = vshrl.u32 %v834, 7
    %v836 = vsub.s32 0, %v835
    %v837 = vrot.slane %v832, %v836
    %v839 = vadd.f32 %v829, %v837
    %v840 = vadd.f32 %v830, %v837
    %v841 = vmax.f32 %v839, 0.0
    %v842 = vmax.f32 %v840, 0.0
    %v843 = vpack.c.bf16 %v842, %v841
    %844 = vst [vmem:[#allocation2 + $0x20] sm:$0xff] %v843
    %v845 = vld [vmem:[#allocation2] sm:$0xff]
    %v846 = vld [vmem:[#allocation2 + $0x8] sm:$0xff]
    %v847 = vld [vmem:[#allocation2 + $0x10] sm:$0xff]
    %v848 = vld [vmem:[#allocation2 + $0x18] sm:$0xff]
    %v849 = vld [vmem:[#allocation2 + $0x20] sm:$0xff]
    %v850 = vld [vmem:[#allocation3 + $0x200] sm:$0xff]
    %v851 = vld [vmem:[#allocation3 + $0x208] sm:$0xff]
    %v852 = vld [vmem:[#allocation3 + $0x210] sm:$0xff]
    %v853 = vld [vmem:[#allocation3 + $0x218] sm:$0xff]
    %v854 = vld [vmem:[#allocation3 + $0x220] sm:$0xff]
    %v855 = vld [vmem:[#allocation3 + $0x228] sm:$0xff]
    %v856 = vld [vmem:[#allocation3 + $0x230] sm:$0xff]
    %v857 = vld [vmem:[#allocation3 + $0x238] sm:$0xff]
    %v858 = vld [vmem:[#allocation3 + $0x240] sm:$0xff]
    %v859 = vld [vmem:[#allocation3 + $0x248] sm:$0xff]
    %v860 = vld [vmem:[#allocation3 + $0x250] sm:$0xff]
    %v861 = vld [vmem:[#allocation3 + $0x258] sm:$0xff]
    %v862 = vld [vmem:[#allocation3 + $0x260] sm:$0xff]
    %v863 = vld [vmem:[#allocation3 + $0x268] sm:$0xff]
    %v864 = vld [vmem:[#allocation3 + $0x270] sm:$0xff]
    %v865 = vld [vmem:[#allocation3 + $0x278] sm:$0xff]
    %v866 = vld [vmem:[#allocation3 + $0x280] sm:$0xff]
    %v867 = vld [vmem:[#allocation3 + $0x288] sm:$0xff]
    %v868 = vld [vmem:[#allocation3 + $0x290] sm:$0xff]
    %v869 = vld [vmem:[#allocation3 + $0x298] sm:$0xff]
    %v870 = vld [vmem:[#allocation3 + $0x2a0] sm:$0xff]
    %v871 = vld [vmem:[#allocation3 + $0x2a8] sm:$0xff]
    %v872 = vld [vmem:[#allocation3 + $0x2b0] sm:$0xff]
    %v873 = vld [vmem:[#allocation3 + $0x2b8] sm:$0xff]
    %v874 = vld [vmem:[#allocation3 + $0x2c0] sm:$0xff]
    %v875 = vld [vmem:[#allocation3 + $0x2c8] sm:$0xff]
    %v876 = vld [vmem:[#allocation3 + $0x2d0] sm:$0xff]
    %v877 = vld [vmem:[#allocation3 + $0x2d8] sm:$0xff]
    %v878 = vld [vmem:[#allocation3 + $0x2e0] sm:$0xff]
    %v879 = vld [vmem:[#allocation3 + $0x2e8] sm:$0xff]
    %v880 = vld [vmem:[#allocation3 + $0x2f0] sm:$0xff]
    %v881 = vld [vmem:[#allocation3 + $0x2f8] sm:$0xff]
    %v882 = vld [vmem:[#allocation3 + $0x300] sm:$0xff]
    %v883 = vld [vmem:[#allocation3 + $0x308] sm:$0xff]
    %v884 = vld [vmem:[#allocation3 + $0x310] sm:$0xff]
    %v885 = vld [vmem:[#allocation3 + $0x318] sm:$0xff]
    %v886 = vld [vmem:[#allocation3 + $0x320] sm:$0xff]
    %v887 = vld [vmem:[#allocation3 + $0x328] sm:$0xff]
    %v888 = vld [vmem:[#allocation3 + $0x330] sm:$0xff]
    %v889 = vld [vmem:[#allocation3 + $0x338] sm:$0xff]
    %v890 = vld [vmem:[#allocation3 + $0x340] sm:$0xff]
    %v891 = vld [vmem:[#allocation3 + $0x348] sm:$0xff]
    %v892 = vld [vmem:[#allocation3 + $0x350] sm:$0xff]
    %v893 = vld [vmem:[#allocation3 + $0x358] sm:$0xff]
    %v894 = vld [vmem:[#allocation3 + $0x360] sm:$0xff]
    %v895 = vld [vmem:[#allocation3 + $0x368] sm:$0xff]
    %v896 = vld [vmem:[#allocation3 + $0x370] sm:$0xff]
    %v897 = vld [vmem:[#allocation3 + $0x378] sm:$0xff]
    %v898 = vld [vmem:[#allocation3 + $0x380] sm:$0xff]
    %v899 = vld [vmem:[#allocation3 + $0x388] sm:$0xff]
    %v900 = vld [vmem:[#allocation3 + $0x390] sm:$0xff]
    %v901 = vld [vmem:[#allocation3 + $0x398] sm:$0xff]
    %v902 = vld [vmem:[#allocation3 + $0x3a0] sm:$0xff]
    %v903 = vld [vmem:[#allocation3 + $0x3a8] sm:$0xff]
    %v904 = vld [vmem:[#allocation3 + $0x3b0] sm:$0xff]
    %v905 = vld [vmem:[#allocation3 + $0x3b8] sm:$0xff]
    %v906 = vld [vmem:[#allocation3 + $0x3c0] sm:$0xff]
    %v907 = vld [vmem:[#allocation3 + $0x3c8] sm:$0xff]
    %v908 = vld [vmem:[#allocation3 + $0x3d0] sm:$0xff]
    %v909 = vld [vmem:[#allocation3 + $0x3d8] sm:$0xff]
    %v910 = vld [vmem:[#allocation3 + $0x3e0] sm:$0xff]
    %v911 = vld [vmem:[#allocation3 + $0x3e8] sm:$0xff]
    %v912 = vld [vmem:[#allocation3 + $0x3f0] sm:$0xff]
    %v913 = vld [vmem:[#allocation3 + $0x3f8] sm:$0xff]
    %v914 = vld [vmem:[#allocation3 + $0x400] sm:$0xff]
    %v915 = vld [vmem:[#allocation3 + $0x408] sm:$0xff]
    %v916 = vld [vmem:[#allocation3 + $0x410] sm:$0xff]
    %v917 = vld [vmem:[#allocation3 + $0x418] sm:$0xff]
    %v918 = vld [vmem:[#allocation3 + $0x420] sm:$0xff]
    %v919 = vld [vmem:[#allocation3 + $0x428] sm:$0xff]
    %v920 = vld [vmem:[#allocation3 + $0x430] sm:$0xff]
    %v921 = vld [vmem:[#allocation3 + $0x438] sm:$0xff]
    %v922 = vld [vmem:[#allocation3 + $0x440] sm:$0xff]
    %v923 = vld [vmem:[#allocation3 + $0x448] sm:$0xff]
    %v924 = vld [vmem:[#allocation3 + $0x450] sm:$0xff]
    %v925 = vld [vmem:[#allocation3 + $0x458] sm:$0xff]
    %v926 = vld [vmem:[#allocation3 + $0x460] sm:$0xff]
    %v927 = vld [vmem:[#allocation3 + $0x468] sm:$0xff]
    %v928 = vld [vmem:[#allocation3 + $0x470] sm:$0xff]
    %v929 = vld [vmem:[#allocation3 + $0x478] sm:$0xff]
    %v1010 = vunpack.c.l.b16 %v850
    %v1011 = vunpack.c.h.b16 %v850
    %v1012 = vunpack.c.l.b16 %v851
    %v1013 = vunpack.c.h.b16 %v851
    %v1014 = vunpack.c.l.b16 %v852
    %v1015 = vunpack.c.h.b16 %v852
    %v1016 = vunpack.c.l.b16 %v853
    %v1017 = vunpack.c.h.b16 %v853
    %v1018 = vunpack.c.l.b16 %v854
    %v1019 = vunpack.c.h.b16 %v854
    %v1020 = vunpack.c.l.b16 %v855
    %v1021 = vunpack.c.h.b16 %v855
    %v1022 = vunpack.c.l.b16 %v856
    %v1023 = vunpack.c.h.b16 %v856
    %v1024 = vunpack.c.l.b16 %v857
    %v1025 = vunpack.c.h.b16 %v857
    %v1026 = vunpack.c.l.b16 %v858
    %v1027 = vunpack.c.h.b16 %v858
    %v1028 = vunpack.c.l.b16 %v859
    %v1029 = vunpack.c.h.b16 %v859
    %v1030 = vunpack.c.l.b16 %v860
    %v1031 = vunpack.c.h.b16 %v860
    %v1032 = vunpack.c.l.b16 %v861
    %v1033 = vunpack.c.h.b16 %v861
    %v1034 = vunpack.c.l.b16 %v862
    %v1035 = vunpack.c.h.b16 %v862
    %v1036 = vunpack.c.l.b16 %v863
    %v1037 = vunpack.c.h.b16 %v863
    %v1038 = vunpack.c.l.b16 %v864
    %v1039 = vunpack.c.h.b16 %v864
    %v1040 = vunpack.c.l.b16 %v865
    %v1041 = vunpack.c.h.b16 %v865
    %v1042 = vunpack.c.l.b16 %v866
    %v1043 = vunpack.c.h.b16 %v866
    %v1044 = vunpack.c.l.b16 %v867
    %v1045 = vunpack.c.h.b16 %v867
    %v1046 = vunpack.c.l.b16 %v868
    %v1047 = vunpack.c.h.b16 %v868
    %v1048 = vunpack.c.l.b16 %v869
    %v1049 = vunpack.c.h.b16 %v869
    %v1050 = vunpack.c.l.b16 %v870
    %v1051 = vunpack.c.h.b16 %v870
    %v1052 = vunpack.c.l.b16 %v871
    %v1053 = vunpack.c.h.b16 %v871
    %v1054 = vunpack.c.l.b16 %v872
    %v1055 = vunpack.c.h.b16 %v872
    %v1056 = vunpack.c.l.b16 %v873
    %v1057 = vunpack.c.h.b16 %v873
    %v1058 = vunpack.c.l.b16 %v874
    %v1059 = vunpack.c.h.b16 %v874
    %v1060 = vunpack.c.l.b16 %v875
    %v1061 = vunpack.c.h.b16 %v875
    %v1062 = vunpack.c.l.b16 %v876
    %v1063 = vunpack.c.h.b16 %v876
    %v1064 = vunpack.c.l.b16 %v877
    %v1065 = vunpack.c.h.b16 %v877
    %v1066 = vunpack.c.l.b16 %v878
    %v1067 = vunpack.c.h.b16 %v878
    %v1068 = vunpack.c.l.b16 %v879
    %v1069 = vunpack.c.h.b16 %v879
    %v1070 = vunpack.c.l.b16 %v880
    %v1071 = vunpack.c.h.b16 %v880
    %v1072 = vunpack.c.l.b16 %v881
    %v1073 = vunpack.c.h.b16 %v881
    %v1074 = vunpack.c.l.b16 %v882
    %v1075 = vunpack.c.h.b16 %v882
    %v1076 = vunpack.c.l.b16 %v883
    %v1077 = vunpack.c.h.b16 %v883
    %v1078 = vunpack.c.l.b16 %v884
    %v1079 = vunpack.c.h.b16 %v884
    %v1080 = vunpack.c.l.b16 %v885
    %v1081 = vunpack.c.h.b16 %v885
    %v1082 = vunpack.c.l.b16 %v886
    %v1083 = vunpack.c.h.b16 %v886
    %v1084 = vunpack.c.l.b16 %v887
    %v1085 = vunpack.c.h.b16 %v887
    %v1086 = vunpack.c.l.b16 %v888
    %v1087 = vunpack.c.h.b16 %v888
    %v1088 = vunpack.c.l.b16 %v889
    %v1089 = vunpack.c.h.b16 %v889
    %v1090 = vunpack.c.l.b16 %v890
    %v1091 = vunpack.c.h.b16 %v890
    %v1092 = vunpack.c.l.b16 %v891
    %v1093 = vunpack.c.h.b16 %v891
    %v1094 = vunpack.c.l.b16 %v892
    %v1095 = vunpack.c.h.b16 %v892
    %v1096 = vunpack.c.l.b16 %v893
    %v1097 = vunpack.c.h.b16 %v893
    %v1098 = vunpack.c.l.b16 %v894
    %v1099 = vunpack.c.h.b16 %v894
    %v1100 = vunpack.c.l.b16 %v895
    %v1101 = vunpack.c.h.b16 %v895
    %v1102 = vunpack.c.l.b16 %v896
    %v1103 = vunpack.c.h.b16 %v896
    %v1104 = vunpack.c.l.b16 %v897
    %v1105 = vunpack.c.h.b16 %v897
    %v1106 = vunpack.c.l.b16 %v898
    %v1107 = vunpack.c.h.b16 %v898
    %v1108 = vunpack.c.l.b16 %v899
    %v1109 = vunpack.c.h.b16 %v899
    %v1110 = vunpack.c.l.b16 %v900
    %v1111 = vunpack.c.h.b16 %v900
    %v1112 = vunpack.c.l.b16 %v901
    %v1113 = vunpack.c.h.b16 %v901
    %v1114 = vunpack.c.l.b16 %v902
    %v1115 = vunpack.c.h.b16 %v902
    %v1116 = vunpack.c.l.b16 %v903
    %v1117 = vunpack.c.h.b16 %v903
    %v1118 = vunpack.c.l.b16 %v904
    %v1119 = vunpack.c.h.b16 %v904
    %v1120 = vunpack.c.l.b16 %v905
    %v1121 = vunpack.c.h.b16 %v905
    %v1122 = vunpack.c.l.b16 %v906
    %v1123 = vunpack.c.h.b16 %v906
    %v1124 = vunpack.c.l.b16 %v907
    %v1125 = vunpack.c.h.b16 %v907
    %v1126 = vunpack.c.l.b16 %v908
    %v1127 = vunpack.c.h.b16 %v908
    %v1128 = vunpack.c.l.b16 %v909
    %v1129 = vunpack.c.h.b16 %v909
    %v1130 = vunpack.c.l.b16 %v910
    %v1131 = vunpack.c.h.b16 %v910
    %v1132 = vunpack.c.l.b16 %v911
    %v1133 = vunpack.c.h.b16 %v911
    %v1134 = vunpack.c.l.b16 %v912
    %v1135 = vunpack.c.h.b16 %v912
    %v1136 = vunpack.c.l.b16 %v913
    %v1137 = vunpack.c.h.b16 %v913
    %v1138 = vunpack.c.l.b16 %v914
    %v1139 = vunpack.c.h.b16 %v914
    %v1140 = vunpack.c.l.b16 %v915
    %v1141 = vunpack.c.h.b16 %v915
    %v1142 = vunpack.c.l.b16 %v916
    %v1143 = vunpack.c.h.b16 %v916
    %v1144 = vunpack.c.l.b16 %v917
    %v1145 = vunpack.c.h.b16 %v917
    %v1146 = vunpack.c.l.b16 %v918
    %v1147 = vunpack.c.h.b16 %v918
    %v1148 = vunpack.c.l.b16 %v919
    %v1149 = vunpack.c.h.b16 %v919
    %v1150 = vunpack.c.l.b16 %v920
    %v1151 = vunpack.c.h.b16 %v920
    %v1152 = vunpack.c.l.b16 %v921
    %v1153 = vunpack.c.h.b16 %v921
    %v1154 = vunpack.c.l.b16 %v922
    %v1155 = vunpack.c.h.b16 %v922
    %v1156 = vunpack.c.l.b16 %v923
    %v1157 = vunpack.c.h.b16 %v923
    %v1158 = vunpack.c.l.b16 %v924
    %v1159 = vunpack.c.h.b16 %v924
    %v1160 = vunpack.c.l.b16 %v925
    %v1161 = vunpack.c.h.b16 %v925
    %v1162 = vunpack.c.l.b16 %v926
    %v1163 = vunpack.c.h.b16 %v926
    %v1164 = vunpack.c.l.b16 %v927
    %v1165 = vunpack.c.h.b16 %v927
    %v1166 = vunpack.c.l.b16 %v928
    %v1167 = vunpack.c.h.b16 %v928
    %v1168 = vunpack.c.l.b16 %v929
    %v1169 = vunpack.c.h.b16 %v929
    %v1170 = vpack.c.b16 %v1012, %v1010
    %v1171 = vpack.c.b16 %v1013, %v1011
    %v1172 = vpack.c.b16 %v1016, %v1014
    %v1173 = vpack.c.b16 %v1017, %v1015
    %v1174 = vpack.c.b16 %v1020, %v1018
    %v1175 = vpack.c.b16 %v1021, %v1019
    %v1176 = vpack.c.b16 %v1024, %v1022
    %v1177 = vpack.c.b16 %v1025, %v1023
    %v1178 = vpack.c.b16 %v1028, %v1026
    %v1179 = vpack.c.b16 %v1029, %v1027
    %v1180 = vpack.c.b16 %v1032, %v1030
    %v1181 = vpack.c.b16 %v1033, %v1031
    %v1182 = vpack.c.b16 %v1036, %v1034
    %v1183 = vpack.c.b16 %v1037, %v1035
    %v1184 = vpack.c.b16 %v1040, %v1038
    %v1185 = vpack.c.b16 %v1041, %v1039
    %v1186 = vpack.c.b16 %v1044, %v1042
    %v1187 = vpack.c.b16 %v1045, %v1043
    %v1188 = vpack.c.b16 %v1048, %v1046
    %v1189 = vpack.c.b16 %v1049, %v1047
    %v1190 = vpack.c.b16 %v1052, %v1050
    %v1191 = vpack.c.b16 %v1053, %v1051
    %v1192 = vpack.c.b16 %v1056, %v1054
    %v1193 = vpack.c.b16 %v1057, %v1055
    %v1194 = vpack.c.b16 %v1060, %v1058
    %v1195 = vpack.c.b16 %v1061, %v1059
    %v1196 = vpack.c.b16 %v1064, %v1062
    %v1197 = vpack.c.b16 %v1065, %v1063
    %v1198 = vpack.c.b16 %v1068, %v1066
    %v1199 = vpack.c.b16 %v1069, %v1067
    %v1200 = vpack.c.b16 %v1072, %v1070
    %v1201 = vpack.c.b16 %v1073, %v1071
    %v1202 = vpack.c.b16 %v1076, %v1074
    %v1203 = vpack.c.b16 %v1077, %v1075
    %v1204 = vpack.c.b16 %v1080, %v1078
    %v1205 = vpack.c.b16 %v1081, %v1079
    %v1206 = vpack.c.b16 %v1084, %v1082
    %v1207 = vpack.c.b16 %v1085, %v1083
    %v1208 = vpack.c.b16 %v1088, %v1086
    %v1209 = vpack.c.b16 %v1089, %v1087
    %v1210 = vpack.c.b16 %v1092, %v1090
    %v1211 = vpack.c.b16 %v1093, %v1091
    %v1212 = vpack.c.b16 %v1096, %v1094
    %v1213 = vpack.c.b16 %v1097, %v1095
    %v1214 = vpack.c.b16 %v1100, %v1098
    %v1215 = vpack.c.b16 %v1101, %v1099
    %v1216 = vpack.c.b16 %v1104, %v1102
    %v1217 = vpack.c.b16 %v1105, %v1103
    %v1218 = vpack.c.b16 %v1108, %v1106
    %v1219 = vpack.c.b16 %v1109, %v1107
    %v1220 = vpack.c.b16 %v1112, %v1110
    %v1221 = vpack.c.b16 %v1113, %v1111
    %v1222 = vpack.c.b16 %v1116, %v1114
    %v1223 = vpack.c.b16 %v1117, %v1115
    %v1224 = vpack.c.b16 %v1120, %v1118
    %v1225 = vpack.c.b16 %v1121, %v1119
    %v1226 = vpack.c.b16 %v1124, %v1122
    %v1227 = vpack.c.b16 %v1125, %v1123
    %v1228 = vpack.c.b16 %v1128, %v1126
    %v1229 = vpack.c.b16 %v1129, %v1127
    %v1230 = vpack.c.b16 %v1132, %v1130
    %v1231 = vpack.c.b16 %v1133, %v1131
    %v1232 = vpack.c.b16 %v1136, %v1134
    %v1233 = vpack.c.b16 %v1137, %v1135
    %v1234 = vpack.c.b16 %v1140, %v1138
    %v1235 = vpack.c.b16 %v1141, %v1139
    %v1236 = vpack.c.b16 %v1144, %v1142
    %v1237 = vpack.c.b16 %v1145, %v1143
    %v1238 = vpack.c.b16 %v1148, %v1146
    %v1239 = vpack.c.b16 %v1149, %v1147
    %v1240 = vpack.c.b16 %v1152, %v1150
    %v1241 = vpack.c.b16 %v1153, %v1151
    %v1242 = vpack.c.b16 %v1156, %v1154
    %v1243 = vpack.c.b16 %v1157, %v1155
    %v1244 = vpack.c.b16 %v1160, %v1158
    %v1245 = vpack.c.b16 %v1161, %v1159
    %v1246 = vpack.c.b16 %v1164, %v1162
    %v1247 = vpack.c.b16 %v1165, %v1163
    %v1248 = vpack.c.b16 %v1168, %v1166
    %v1249 = vpack.c.b16 %v1169, %v1167
    %1330 = vmatprep.subr.bf16.mxu0 %v1171
    %1331 = vmatpush1.bf16.msra.mxu0 %v1170
    %1332 = vmatprep.subr.bf16.mxu0 %v1173
    %1333 = vmatpush1.bf16.msra.mxu0 %v1172
    %1334 = vmatprep.subr.bf16.mxu0 %v1175
    %1335 = vmatpush1.bf16.msra.mxu0 %v1174
    %1336 = vmatprep.subr.bf16.mxu0 %v1177
    %1337 = vmatpush1.bf16.msra.mxu0 %v1176
    %1338 = vmatprep.subr.bf16.mxu0 %v1179
    %1339 = vmatpush1.bf16.msra.mxu0 %v1178
    %1340 = vmatprep.subr.bf16.mxu0 %v1181
    %1341 = vmatpush1.bf16.msra.mxu0 %v1180
    %1342 = vmatprep.subr.bf16.mxu0 %v1183
    %1343 = vmatpush1.bf16.msra.mxu0 %v1182
    %1344 = vmatprep.subr.bf16.mxu0 %v1185
    %1345 = vmatpush1.bf16.msra.mxu0 %v1184
    %1346 = vmatprep.subr.bf16.mxu0 %v1187
    %1347 = vmatpush1.bf16.msra.mxu0 %v1186
    %1348 = vmatprep.subr.bf16.mxu0 %v1189
    %1349 = vmatpush1.bf16.msra.mxu0 %v1188
    %1350 = vmatprep.subr.bf16.mxu0 %v1191
    %1351 = vmatpush1.bf16.msra.mxu0 %v1190
    %1352 = vmatprep.subr.bf16.mxu0 %v1193
    %1353 = vmatpush1.bf16.msra.mxu0 %v1192
    %1354 = vmatprep.subr.bf16.mxu0 %v1195
    %1355 = vmatpush1.bf16.msra.mxu0 %v1194
    %1356 = vmatprep.subr.bf16.mxu0 %v1197
    %1357 = vmatpush1.bf16.msra.mxu0 %v1196
    %1358 = vmatprep.subr.bf16.mxu0 %v1199
    %1359 = vmatpush1.bf16.msra.mxu0 %v1198
    %1360 = vmatprep.subr.bf16.mxu0 %v1201
    %1361 = vmatpush1.bf16.msra.mxu0 %v1200
    %1362 = vmatprep.mubr.bf16.mxu0 %v846
    %1363 = vmatmul.mubr.bf16.gmra.mrb[0].mxu0 %v845
    %v1364 = vpop.f32.mrb[0].mxu0
    %v1365 = vadd.f32 0.0, %v1364
    %v1366 = vpop.f32.mrb[0].mxu0
    %v1367 = vadd.f32 0.0, %v1366
    %v1368 = vpop.f32.mrb[0].mxu0
    %v1369 = vadd.f32 0.0, %v1368
    %v1370 = vpop.f32.mrb[0].mxu0
    %v1371 = vadd.f32 0.0, %v1370
    %1372 = vdwg.mxu0
    %1373 = vmatprep.subr.bf16.mxu0 %v1203
    %1374 = vmatpush1.bf16.msra.mxu0 %v1202
    %1375 = vmatprep.subr.bf16.mxu0 %v1205
    %1376 = vmatpush1.bf16.msra.mxu0 %v1204
    %1377 = vmatprep.subr.bf16.mxu0 %v1207
    %1378 = vmatpush1.bf16.msra.mxu0 %v1206
    %1379 = vmatprep.subr.bf16.mxu0 %v1209
    %1380 = vmatpush1.bf16.msra.mxu0 %v1208
    %1381 = vmatprep.subr.bf16.mxu0 %v1211
    %1382 = vmatpush1.bf16.msra.mxu0 %v1210
    %1383 = vmatprep.subr.bf16.mxu0 %v1213
    %1384 = vmatpush1.bf16.msra.mxu0 %v1212
    %1385 = vmatprep.subr.bf16.mxu0 %v1215
    %1386 = vmatpush1.bf16.msra.mxu0 %v1214
    %1387 = vmatprep.subr.bf16.mxu0 %v1217
    %1388 = vmatpush1.bf16.msra.mxu0 %v1216
    %1389 = vmatprep.subr.bf16.mxu0 %v1219
    %1390 = vmatpush1.bf16.msra.mxu0 %v1218
    %1391 = vmatprep.subr.bf16.mxu0 %v1221
    %1392 = vmatpush1.bf16.msra.mxu0 %v1220
    %1393 = vmatprep.subr.bf16.mxu0 %v1223
    %1394 = vmatpush1.bf16.msra.mxu0 %v1222
    %1395 = vmatprep.subr.bf16.mxu0 %v1225
    %1396 = vmatpush1.bf16.msra.mxu0 %v1224
    %1397 = vmatprep.subr.bf16.mxu0 %v1227
    %1398 = vmatpush1.bf16.msra.mxu0 %v1226
    %1399 = vmatprep.subr.bf16.mxu0 %v1229
    %1400 = vmatpush1.bf16.msra.mxu0 %v1228
    %1401 = vmatprep.subr.bf16.mxu0 %v1231
    %1402 = vmatpush1.bf16.msra.mxu0 %v1230
    %1403 = vmatprep.subr.bf16.mxu0 %v1233
    %1404 = vmatpush1.bf16.msra.mxu0 %v1232
    %1405 = vmatprep.mubr.bf16.mxu0 %v848
    %1406 = vmatmul.mubr.bf16.gmra.mrb[0].mxu0 %v847
    %v1407 = vpop.f32.mrb[0].mxu0
    %v1408 = vadd.f32 %v1365, %v1407
    %v1409 = vpop.f32.mrb[0].mxu0
    %v1410 = vadd.f32 %v1367, %v1409
    %v1411 = vpop.f32.mrb[0].mxu0
    %v1412 = vadd.f32 %v1369, %v1411
    %v1413 = vpop.f32.mrb[0].mxu0
    %v1414 = vadd.f32 %v1371, %v1413
    %1415 = vdwg.mxu0
    %1416 = vmatprep.subr.bf16.mxu0 %v1235
    %1417 = vmatpush1.bf16.msra.mxu0 %v1234
    %1418 = vmatprep.subr.bf16.mxu0 %v1237
    %1419 = vmatpush1.bf16.msra.mxu0 %v1236
    %1420 = vmatprep.subr.bf16.mxu0 %v1239
    %1421 = vmatpush1.bf16.msra.mxu0 %v1238
    %1422 = vmatprep.subr.bf16.mxu0 %v1241
    %1423 = vmatpush1.bf16.msra.mxu0 %v1240
    %1424 = vmatprep.subr.bf16.mxu0 %v1243
    %1425 = vmatpush1.bf16.msra.mxu0 %v1242
    %1426 = vmatprep.subr.bf16.mxu0 %v1245
    %1427 = vmatpush1.bf16.msra.mxu0 %v1244
    %1428 = vmatprep.subr.bf16.mxu0 %v1247
    %1429 = vmatpush1.bf16.msra.mxu0 %v1246
    %1430 = vmatprep.subr.bf16.mxu0 %v1249
    %1431 = vmatpush1.bf16.msra.mxu0 %v1248
    %1432 = vmatprep.subr.bf16.mxu0 0
    %1433 = vmatpush1.bf16.msra.mxu0 0
    %1434 = vmatprep.subr.bf16.mxu0 0
    %1435 = vmatpush1.bf16.msra.mxu0 0
    %1436 = vmatprep.subr.bf16.mxu0 0
    %1437 = vmatpush1.bf16.msra.mxu0 0
    %1438 = vmatprep.subr.bf16.mxu0 0
    %1439 = vmatpush1.bf16.msra.mxu0 0
    %1440 = vmatprep.subr.bf16.mxu0 0
    %1441 = vmatpush1.bf16.msra.mxu0 0
    %1442 = vmatprep.subr.bf16.mxu0 0
    %1443 = vmatpush1.bf16.msra.mxu0 0
    %1444 = vmatprep.subr.bf16.mxu0 0
    %1445 = vmatpush1.bf16.msra.mxu0 0
    %1446 = vmatprep.subr.bf16.mxu0 0
    %1447 = vmatpush1.bf16.msra.mxu0 0
    %1448 = vmatprep.mubr.bf16.mxu0 0
    %1449 = vmatmul.mubr.bf16.gmra.mrb[0].mxu0 %v849
    %v1450 = vpop.f32.mrb[0].mxu0
    %v1451 = vadd.f32 %v1408, %v1450
    %v1452 = vpop.f32.mrb[0].mxu0
    %v1453 = vadd.f32 %v1410, %v1452
    %v1454 = vpop.f32.mrb[0].mxu0
    %v1455 = vadd.f32 %v1412, %v1454
    %v1456 = vpop.f32.mrb[0].mxu0
    %v1457 = vadd.f32 %v1414, %v1456
    %1458 = vdwg.mxu0
    %s1459 = scalar_lea.vmem %s1, 4
    %v1460 = vld [vmem:[%s1459] sm:$0x1]
    %v1462 = vlaneseq
    %v1463 = vshrl.u32 %v1462, 7
    %v1464 = vsub.s32 0, %v1463
    %v1465 = vrot.slane %v1460, %v1464
    %v1467 = vadd.f32 %v1451, %v1465
    %v1468 = vadd.f32 %v1455, %v1465
    %v1469 = vmax.f32 %v1467, 0.0
    %v1470 = vmax.f32 %v1468, 0.0
    %v1471 = vpack.c.bf16 %v1470, %v1469
    %s1472 = scalar_lea.vmem [#allocation5], 128
    %v1473 = vld [vmem:[%s1472] sm:$0xf]
    %v1474 = vld [vmem:[%s1472 + $0x4] sm:$0xf]
    %v1475 = vld [vmem:[%s1472 + $0x8] sm:$0xf]
    %v1476 = vld [vmem:[%s1472 + $0xc] sm:$0xf]
    %v1477 = vld [vmem:[%s1472 + $0x10] sm:$0xf]
    %v1478 = vld [vmem:[%s1472 + $0x14] sm:$0xf]
    %v1479 = vld [vmem:[%s1472 + $0x18] sm:$0xf]
    %v1480 = vld [vmem:[%s1472 + $0x1c] sm:$0xf]
    %v1481 = vld [vmem:[%s1472 + $0x20] sm:$0xf]
    %v1482 = vld [vmem:[%s1472 + $0x24] sm:$0xf]
    %v1483 = vld [vmem:[%s1472 + $0x28] sm:$0xf]
    %v1484 = vld [vmem:[%s1472 + $0x2c] sm:$0xf]
    %v1485 = vld [vmem:[%s1472 + $0x30] sm:$0xf]
    %v1486 = vld [vmem:[%s1472 + $0x34] sm:$0xf]
    %v1487 = vld [vmem:[%s1472 + $0x38] sm:$0xf]
    %v1488 = vld [vmem:[%s1472 + $0x3c] sm:$0xf]
    %v1505 = vunpack.c.l.b16 %v1473
    %v1506 = vunpack.c.l.b16 %v1474
    %v1507 = vunpack.c.l.b16 %v1475
    %v1508 = vunpack.c.l.b16 %v1476
    %v1509 = vunpack.c.l.b16 %v1477
    %v1510 = vunpack.c.l.b16 %v1478
    %v1511 = vunpack.c.l.b16 %v1479
    %v1512 = vunpack.c.l.b16 %v1480
    %v1513 = vunpack.c.l.b16 %v1481
    %v1514 = vunpack.c.l.b16 %v1482
    %v1515 = vunpack.c.l.b16 %v1483
    %v1516 = vunpack.c.l.b16 %v1484
    %v1517 = vunpack.c.l.b16 %v1485
    %v1518 = vunpack.c.l.b16 %v1486
    %v1519 = vunpack.c.l.b16 %v1487
    %v1520 = vunpack.c.l.b16 %v1488
    %v1521 = vpack.c.b16 %v1506, %v1505
    %v1522 = vpack.c.b16 %v1508, %v1507
    %v1523 = vpack.c.b16 %v1510, %v1509
    %v1524 = vpack.c.b16 %v1512, %v1511
    %v1525 = vpack.c.b16 %v1514, %v1513
    %v1526 = vpack.c.b16 %v1516, %v1515
    %v1527 = vpack.c.b16 %v1518, %v1517
    %v1528 = vpack.c.b16 %v1520, %v1519
    %1537 = vmatprep.subr.bf16.mxu0 0
    %1538 = vmatpush1.bf16.msra.mxu0 %v1521
    %1539 = vmatprep.subr.bf16.mxu0 0
    %1540 = vmatpush1.bf16.msra.mxu0 %v1522
    %1541 = vmatprep.subr.bf16.mxu0 0
    %1542 = vmatpush1.bf16.msra.mxu0 %v1523
    %1543 = vmatprep.subr.bf16.mxu0 0
    %1544 = vmatpush1.bf16.msra.mxu0 %v1524
    %1545 = vmatprep.subr.bf16.mxu0 0
    %1546 = vmatpush1.bf16.msra.mxu0 %v1525
    %1547 = vmatprep.subr.bf16.mxu0 0
    %1548 = vmatpush1.bf16.msra.mxu0 %v1526
    %1549 = vmatprep.subr.bf16.mxu0 0
    %1550 = vmatpush1.bf16.msra.mxu0 %v1527
    %1551 = vmatprep.subr.bf16.mxu0 0
    %1552 = vmatpush1.bf16.msra.mxu0 %v1528
    %1553 = vmatprep.subr.bf16.mxu0 0
    %1554 = vmatpush1.bf16.msra.mxu0 0
    %1555 = vmatprep.subr.bf16.mxu0 0
    %1556 = vmatpush1.bf16.msra.mxu0 0
    %1557 = vmatprep.subr.bf16.mxu0 0
    %1558 = vmatpush1.bf16.msra.mxu0 0
    %1559 = vmatprep.subr.bf16.mxu0 0
    %1560 = vmatpush1.bf16.msra.mxu0 0
    %1561 = vmatprep.subr.bf16.mxu0 0
    %1562 = vmatpush1.bf16.msra.mxu0 0
    %1563 = vmatprep.subr.bf16.mxu0 0
    %1564 = vmatpush1.bf16.msra.mxu0 0
    %1565 = vmatprep.subr.bf16.mxu0 0
    %1566 = vmatpush1.bf16.msra.mxu0 0
    %1567 = vmatprep.subr.bf16.mxu0 0
    %1568 = vmatpush1.bf16.msra.mxu0 0
    %1569 = vmatprep.mubr.bf16.mxu0 0
    %1570 = vmatmul.mubr.bf16.gmra.mrb[0].mxu0 %v1471
    %v1571 = vpop.f32.mrb[0].mxu0
    %v1572 = vadd.f32 0.0, %v1571
    %v1573 = vpop.f32.mrb[0].mxu0
    %v1574 = vpop.f32.mrb[0].mxu0
    %v1575 = vadd.f32 0.0, %v1574
    %v1576 = vpop.f32.mrb[0].mxu0
    %1577 = vdwg.mxu0
    %1578 = vst [vmem:[#allocation2 + $0x28] sm:$0xff] %v1471
    %v1579 = vadd.f32 %v1453, %v1572
    %v1580 = vadd.f32 %v1457, %v1575
    %s1581 = scalar_lea.vmem %s1, 5
    %v1582 = vld [vmem:[%s1581] sm:$0x1]
    %v1584 = vlaneseq
    %v1585 = vshrl.u32 %v1584, 7
    %v1586 = vsub.s32 0, %v1585
    %v1587 = vrot.slane %v1582, %v1586
    %v1589 = vadd.f32 %v1579, %v1587
    %v1590 = vadd.f32 %v1580, %v1587
    %v1591 = vmax.f32 %v1589, 0.0
    %v1592 = vmax.f32 %v1590, 0.0
    %v1593 = vpack.c.bf16 %v1592, %v1591
    %1594 = vst [vmem:[#allocation2 + $0x30] sm:$0xff] %v1593
    %v1595 = vld [vmem:[#allocation2] sm:$0xff]
    %v1596 = vld [vmem:[#allocation2 + $0x8] sm:$0xff]
    %v1597 = vld [vmem:[#allocation2 + $0x10] sm:$0xff]
    %v1598 = vld [vmem:[#allocation2 + $0x18] sm:$0xff]
    %v1599 = vld [vmem:[#allocation2 + $0x20] sm:$0xff]
    %v1600 = vld [vmem:[#allocation2 + $0x28] sm:$0xff]
    %v1601 = vld [vmem:[#allocation2 + $0x30] sm:$0xff]
    %v1602 = vld [vmem:[#allocation3 + $0x480] sm:$0xff]
    %v1603 = vld [vmem:[#allocation3 + $0x488] sm:$0xff]
    %v1604 = vld [vmem:[#allocation3 + $0x490] sm:$0xff]
    %v1605 = vld [vmem:[#allocation3 + $0x498] sm:$0xff]
    %v1606 = vld [vmem:[#allocation3 + $0x4a0] sm:$0xff]
    %v1607 = vld [vmem:[#allocation3 + $0x4a8] sm:$0xff]
    %v1608 = vld [vmem:[#allocation3 + $0x4b0] sm:$0xff]
    %v1609 = vld [vmem:[#allocation3 + $0x4b8] sm:$0xff]
    %v1610 = vld [vmem:[#allocation3 + $0x4c0] sm:$0xff]
    %v1611 = vld [vmem:[#allocation3 + $0x4c8] sm:$0xff]
    %v1612 = vld [vmem:[#allocation3 + $0x4d0] sm:$0xff]
    %v1613 = vld [vmem:[#allocation3 + $0x4d8] sm:$0xff]
    %v1614 = vld [vmem:[#allocation3 + $0x4e0] sm:$0xff]
    %v1615 = vld [vmem:[#allocation3 + $0x4e8] sm:$0xff]
    %v1616 = vld [vmem:[#allocation3 + $0x4f0] sm:$0xff]
    %v1617 = vld [vmem:[#allocation3 + $0x4f8] sm:$0xff]
    %v1618 = vld [vmem:[#allocation3 + $0x500] sm:$0xff]
    %v1619 = vld [vmem:[#allocation3 + $0x508] sm:$0xff]
    %v1620 = vld [vmem:[#allocation3 + $0x510] sm:$0xff]
    %v1621 = vld [vmem:[#allocation3 + $0x518] sm:$0xff]
    %v1622 = vld [vmem:[#allocation3 + $0x520] sm:$0xff]
    %v1623 = vld [vmem:[#allocation3 + $0x528] sm:$0xff]
    %v1624 = vld [vmem:[#allocation3 + $0x530] sm:$0xff]
    %v1625 = vld [vmem:[#allocation3 + $0x538] sm:$0xff]
    %v1626 = vld [vmem:[#allocation3 + $0x540] sm:$0xff]
    %v1627 = vld [vmem:[#allocation3 + $0x548] sm:$0xff]
    %v1628 = vld [vmem:[#allocation3 + $0x550] sm:$0xff]
    %v1629 = vld [vmem:[#allocation3 + $0x558] sm:$0xff]
    %v1630 = vld [vmem:[#allocation3 + $0x560] sm:$0xff]
    %v1631 = vld [vmem:[#allocation3 + $0x568] sm:$0xff]
    %v1632 = vld [vmem:[#allocation3 + $0x570] sm:$0xff]
    %v1633 = vld [vmem:[#allocation3 + $0x578] sm:$0xff]
    %v1634 = vld [vmem:[#allocation3 + $0x580] sm:$0xff]
    %v1635 = vld [vmem:[#allocation3 + $0x588] sm:$0xff]
    %v1636 = vld [vmem:[#allocation3 + $0x590] sm:$0xff]
    %v1637 = vld [vmem:[#allocation3 + $0x598] sm:$0xff]
    %v1638 = vld [vmem:[#allocation3 + $0x5a0] sm:$0xff]
    %v1639 = vld [vmem:[#allocation3 + $0x5a8] sm:$0xff]
    %v1640 = vld [vmem:[#allocation3 + $0x5b0] sm:$0xff]
    %v1641 = vld [vmem:[#allocation3 + $0x5b8] sm:$0xff]
    %v1642 = vld [vmem:[#allocation3 + $0x5c0] sm:$0xff]
    %v1643 = vld [vmem:[#allocation3 + $0x5c8] sm:$0xff]
    %v1644 = vld [vmem:[#allocation3 + $0x5d0] sm:$0xff]
    %v1645 = vld [vmem:[#allocation3 + $0x5d8] sm:$0xff]
    %v1646 = vld [vmem:[#allocation3 + $0x5e0] sm:$0xff]
    %v1647 = vld [vmem:[#allocation3 + $0x5e8] sm:$0xff]
    %v1648 = vld [vmem:[#allocation3 + $0x5f0] sm:$0xff]
    %v1649 = vld [vmem:[#allocation3 + $0x5f8] sm:$0xff]
    %v1650 = vld [vmem:[#allocation3 + $0x600] sm:$0xff]
    %v1651 = vld [vmem:[#allocation3 + $0x608] sm:$0xff]
    %v1652 = vld [vmem:[#allocation3 + $0x610] sm:$0xff]
    %v1653 = vld [vmem:[#allocation3 + $0x618] sm:$0xff]
    %v1654 = vld [vmem:[#allocation3 + $0x620] sm:$0xff]
    %v1655 = vld [vmem:[#allocation3 + $0x628] sm:$0xff]
    %v1656 = vld [vmem:[#allocation3 + $0x630] sm:$0xff]
    %v1657 = vld [vmem:[#allocation3 + $0x638] sm:$0xff]
    %v1658 = vld [vmem:[#allocation3 + $0x640] sm:$0xff]
    %v1659 = vld [vmem:[#allocation3 + $0x648] sm:$0xff]
    %v1660 = vld [vmem:[#allocation3 + $0x650] sm:$0xff]
    %v1661 = vld [vmem:[#allocation3 + $0x658] sm:$0xff]
    %v1662 = vld [vmem:[#allocation3 + $0x660] sm:$0xff]
    %v1663 = vld [vmem:[#allocation3 + $0x668] sm:$0xff]
    %v1664 = vld [vmem:[#allocation3 + $0x670] sm:$0xff]
    %v1665 = vld [vmem:[#allocation3 + $0x678] sm:$0xff]
    %v1666 = vld [vmem:[#allocation3 + $0x680] sm:$0xff]
    %v1667 = vld [vmem:[#allocation3 + $0x688] sm:$0xff]
    %v1668 = vld [vmem:[#allocation3 + $0x690] sm:$0xff]
    %v1669 = vld [vmem:[#allocation3 + $0x698] sm:$0xff]
    %v1670 = vld [vmem:[#allocation3 + $0x6a0] sm:$0xff]
    %v1671 = vld [vmem:[#allocation3 + $0x6a8] sm:$0xff]
    %v1672 = vld [vmem:[#allocation3 + $0x6b0] sm:$0xff]
    %v1673 = vld [vmem:[#allocation3 + $0x6b8] sm:$0xff]
    %v1674 = vld [vmem:[#allocation3 + $0x6c0] sm:$0xff]
    %v1675 = vld [vmem:[#allocation3 + $0x6c8] sm:$0xff]
    %v1676 = vld [vmem:[#allocation3 + $0x6d0] sm:$0xff]
    %v1677 = vld [vmem:[#allocation3 + $0x6d8] sm:$0xff]
    %v1678 = vld [vmem:[#allocation3 + $0x6e0] sm:$0xff]
    %v1679 = vld [vmem:[#allocation3 + $0x6e8] sm:$0xff]
    %v1680 = vld [vmem:[#allocation3 + $0x6f0] sm:$0xff]
    %v1681 = vld [vmem:[#allocation3 + $0x6f8] sm:$0xff]
    %v1682 = vld [vmem:[#allocation3 + $0x700] sm:$0xff]
    %v1683 = vld [vmem:[#allocation3 + $0x708] sm:$0xff]
    %v1684 = vld [vmem:[#allocation3 + $0x710] sm:$0xff]
    %v1685 = vld [vmem:[#allocation3 + $0x718] sm:$0xff]
    %v1686 = vld [vmem:[#allocation3 + $0x720] sm:$0xff]
    %v1687 = vld [vmem:[#allocation3 + $0x728] sm:$0xff]
    %v1688 = vld [vmem:[#allocation3 + $0x730] sm:$0xff]
    %v1689 = vld [vmem:[#allocation3 + $0x738] sm:$0xff]
    %v1690 = vld [vmem:[#allocation3 + $0x740] sm:$0xff]
    %v1691 = vld [vmem:[#allocation3 + $0x748] sm:$0xff]
    %v1692 = vld [vmem:[#allocation3 + $0x750] sm:$0xff]
    %v1693 = vld [vmem:[#allocation3 + $0x758] sm:$0xff]
    %v1694 = vld [vmem:[#allocation3 + $0x760] sm:$0xff]
    %v1695 = vld [vmem:[#allocation3 + $0x768] sm:$0xff]
    %v1696 = vld [vmem:[#allocation3 + $0x770] sm:$0xff]
    %v1697 = vld [vmem:[#allocation3 + $0x778] sm:$0xff]
    %v1698 = vld [vmem:[#allocation3 + $0x780] sm:$0xff]
    %v1699 = vld [vmem:[#allocation3 + $0x788] sm:$0xff]
    %v1700 = vld [vmem:[#allocation3 + $0x790] sm:$0xff]
    %v1701 = vld [vmem:[#allocation3 + $0x798] sm:$0xff]
    %v1702 = vld [vmem:[#allocation3 + $0x7a0] sm:$0xff]
    %v1703 = vld [vmem:[#allocation3 + $0x7a8] sm:$0xff]
    %v1704 = vld [vmem:[#allocation3 + $0x7b0] sm:$0xff]
    %v1705 = vld [vmem:[#allocation3 + $0x7b8] sm:$0xff]
    %v1706 = vld [vmem:[#allocation3 + $0x7c0] sm:$0xff]
    %v1707 = vld [vmem:[#allocation3 + $0x7c8] sm:$0xff]
    %v1708 = vld [vmem:[#allocation3 + $0x7d0] sm:$0xff]
    %v1709 = vld [vmem:[#allocation3 + $0x7d8] sm:$0xff]
    %v1710 = vld [vmem:[#allocation3 + $0x7e0] sm:$0xff]
    %v1711 = vld [vmem:[#allocation3 + $0x7e8] sm:$0xff]
    %v1712 = vld [vmem:[#allocation3 + $0x7f0] sm:$0xff]
    %v1713 = vld [vmem:[#allocation3 + $0x7f8] sm:$0xff]
    %v1826 = vunpack.c.l.b16 %v1602
    %v1827 = vunpack.c.h.b16 %v1602
    %v1828 = vunpack.c.l.b16 %v1603
    %v1829 = vunpack.c.h.b16 %v1603
    %v1830 = vunpack.c.l.b16 %v1604
    %v1831 = vunpack.c.h.b16 %v1604
    %v1832 = vunpack.c.l.b16 %v1605
    %v1833 = vunpack.c.h.b16 %v1605
    %v1834 = vunpack.c.l.b16 %v1606
    %v1835 = vunpack.c.h.b16 %v1606
    %v1836 = vunpack.c.l.b16 %v1607
    %v1837 = vunpack.c.h.b16 %v1607
    %v1838 = vunpack.c.l.b16 %v1608
    %v1839 = vunpack.c.h.b16 %v1608
    %v1840 = vunpack.c.l.b16 %v1609
    %v1841 = vunpack.c.h.b16 %v1609
    %v1842 = vunpack.c.l.b16 %v1610
    %v1843 = vunpack.c.h.b16 %v1610
    %v1844 = vunpack.c.l.b16 %v1611
    %v1845 = vunpack.c.h.b16 %v1611
    %v1846 = vunpack.c.l.b16 %v1612
    %v1847 = vunpack.c.h.b16 %v1612
    %v1848 = vunpack.c.l.b16 %v1613
    %v1849 = vunpack.c.h.b16 %v1613
    %v1850 = vunpack.c.l.b16 %v1614
    %v1851 = vunpack.c.h.b16 %v1614
    %v1852 = vunpack.c.l.b16 %v1615
    %v1853 = vunpack.c.h.b16 %v1615
    %v1854 = vunpack.c.l.b16 %v1616
    %v1855 = vunpack.c.h.b16 %v1616
    %v1856 = vunpack.c.l.b16 %v1617
    %v1857 = vunpack.c.h.b16 %v1617
    %v1858 = vunpack.c.l.b16 %v1618
    %v1859 = vunpack.c.h.b16 %v1618
    %v1860 = vunpack.c.l.b16 %v1619
    %v1861 = vunpack.c.h.b16 %v1619
    %v1862 = vunpack.c.l.b16 %v1620
    %v1863 = vunpack.c.h.b16 %v1620
    %v1864 = vunpack.c.l.b16 %v1621
    %v1865 = vunpack.c.h.b16 %v1621
    %v1866 = vunpack.c.l.b16 %v1622
    %v1867 = vunpack.c.h.b16 %v1622
    %v1868 = vunpack.c.l.b16 %v1623
    %v1869 = vunpack.c.h.b16 %v1623
    %v1870 = vunpack.c.l.b16 %v1624
    %v1871 = vunpack.c.h.b16 %v1624
    %v1872 = vunpack.c.l.b16 %v1625
    %v1873 = vunpack.c.h.b16 %v1625
    %v1874 = vunpack.c.l.b16 %v1626
    %v1875 = vunpack.c.h.b16 %v1626
    %v1876 = vunpack.c.l.b16 %v1627
    %v1877 = vunpack.c.h.b16 %v1627
    %v1878 = vunpack.c.l.b16 %v1628
    %v1879 = vunpack.c.h.b16 %v1628
    %v1880 = vunpack.c.l.b16 %v1629
    %v1881 = vunpack.c.h.b16 %v1629
    %v1882 = vunpack.c.l.b16 %v1630
    %v1883 = vunpack.c.h.b16 %v1630
    %v1884 = vunpack.c.l.b16 %v1631
    %v1885 = vunpack.c.h.b16 %v1631
    %v1886 = vunpack.c.l.b16 %v1632
    %v1887 = vunpack.c.h.b16 %v1632
    %v1888 = vunpack.c.l.b16 %v1633
    %v1889 = vunpack.c.h.b16 %v1633
    %v1890 = vunpack.c.l.b16 %v1634
    %v1891 = vunpack.c.h.b16 %v1634
    %v1892 = vunpack.c.l.b16 %v1635
    %v1893 = vunpack.c.h.b16 %v1635
    %v1894 = vunpack.c.l.b16 %v1636
    %v1895 = vunpack.c.h.b16 %v1636
    %v1896 = vunpack.c.l.b16 %v1637
    %v1897 = vunpack.c.h.b16 %v1637
    %v1898 = vunpack.c.l.b16 %v1638
    %v1899 = vunpack.c.h.b16 %v1638
    %v1900 = vunpack.c.l.b16 %v1639
    %v1901 = vunpack.c.h.b16 %v1639
    %v1902 = vunpack.c.l.b16 %v1640
    %v1903 = vunpack.c.h.b16 %v1640
    %v1904 = vunpack.c.l.b16 %v1641
    %v1905 = vunpack.c.h.b16 %v1641
    %v1906 = vunpack.c.l.b16 %v1642
    %v1907 = vunpack.c.h.b16 %v1642
    %v1908 = vunpack.c.l.b16 %v1643
    %v1909 = vunpack.c.h.b16 %v1643
    %v1910 = vunpack.c.l.b16 %v1644
    %v1911 = vunpack.c.h.b16 %v1644
    %v1912 = vunpack.c.l.b16 %v1645
    %v1913 = vunpack.c.h.b16 %v1645
    %v1914 = vunpack.c.l.b16 %v1646
    %v1915 = vunpack.c.h.b16 %v1646
    %v1916 = vunpack.c.l.b16 %v1647
    %v1917 = vunpack.c.h.b16 %v1647
    %v1918 = vunpack.c.l.b16 %v1648
    %v1919 = vunpack.c.h.b16 %v1648
    %v1920 = vunpack.c.l.b16 %v1649
    %v1921 = vunpack.c.h.b16 %v1649
    %v1922 = vunpack.c.l.b16 %v1650
    %v1923 = vunpack.c.h.b16 %v1650
    %v1924 = vunpack.c.l.b16 %v1651
    %v1925 = vunpack.c.h.b16 %v1651
    %v1926 = vunpack.c.l.b16 %v1652
    %v1927 = vunpack.c.h.b16 %v1652
    %v1928 = vunpack.c.l.b16 %v1653
    %v1929 = vunpack.c.h.b16 %v1653
    %v1930 = vunpack.c.l.b16 %v1654
    %v1931 = vunpack.c.h.b16 %v1654
    %v1932 = vunpack.c.l.b16 %v1655
    %v1933 = vunpack.c.h.b16 %v1655
    %v1934 = vunpack.c.l.b16 %v1656
    %v1935 = vunpack.c.h.b16 %v1656
    %v1936 = vunpack.c.l.b16 %v1657
    %v1937 = vunpack.c.h.b16 %v1657
    %v1938 = vunpack.c.l.b16 %v1658
    %v1939 = vunpack.c.h.b16 %v1658
    %v1940 = vunpack.c.l.b16 %v1659
    %v1941 = vunpack.c.h.b16 %v1659
    %v1942 = vunpack.c.l.b16 %v1660
    %v1943 = vunpack.c.h.b16 %v1660
    %v1944 = vunpack.c.l.b16 %v1661
    %v1945 = vunpack.c.h.b16 %v1661
    %v1946 = vunpack.c.l.b16 %v1662
    %v1947 = vunpack.c.h.b16 %v1662
    %v1948 = vunpack.c.l.b16 %v1663
    %v1949 = vunpack.c.h.b16 %v1663
    %v1950 = vunpack.c.l.b16 %v1664
    %v1951 = vunpack.c.h.b16 %v1664
    %v1952 = vunpack.c.l.b16 %v1665
    %v1953 = vunpack.c.h.b16 %v1665
    %v1954 = vunpack.c.l.b16 %v1666
    %v1955 = vunpack.c.h.b16 %v1666
    %v1956 = vunpack.c.l.b16 %v1667
    %v1957 = vunpack.c.h.b16 %v1667
    %v1958 = vunpack.c.l.b16 %v1668
    %v1959 = vunpack.c.h.b16 %v1668
    %v1960 = vunpack.c.l.b16 %v1669
    %v1961 = vunpack.c.h.b16 %v1669
    %v1962 = vunpack.c.l.b16 %v1670
    %v1963 = vunpack.c.h.b16 %v1670
    %v1964 = vunpack.c.l.b16 %v1671
    %v1965 = vunpack.c.h.b16 %v1671
    %v1966 = vunpack.c.l.b16 %v1672
    %v1967 = vunpack.c.h.b16 %v1672
    %v1968 = vunpack.c.l.b16 %v1673
    %v1969 = vunpack.c.h.b16 %v1673
    %v1970 = vunpack.c.l.b16 %v1674
    %v1971 = vunpack.c.h.b16 %v1674
    %v1972 = vunpack.c.l.b16 %v1675
    %v1973 = vunpack.c.h.b16 %v1675
    %v1974 = vunpack.c.l.b16 %v1676
    %v1975 = vunpack.c.h.b16 %v1676
    %v1976 = vunpack.c.l.b16 %v1677
    %v1977 = vunpack.c.h.b16 %v1677
    %v1978 = vunpack.c.l.b16 %v1678
    %v1979 = vunpack.c.h.b16 %v1678
    %v1980 = vunpack.c.l.b16 %v1679
    %v1981 = vunpack.c.h.b16 %v1679
    %v1982 = vunpack.c.l.b16 %v1680
    %v1983 = vunpack.c.h.b16 %v1680
    %v1984 = vunpack.c.l.b16 %v1681
    %v1985 = vunpack.c.h.b16 %v1681
    %v1986 = vunpack.c.l.b16 %v1682
    %v1987 = vunpack.c.h.b16 %v1682
    %v1988 = vunpack.c.l.b16 %v1683
    %v1989 = vunpack.c.h.b16 %v1683
    %v1990 = vunpack.c.l.b16 %v1684
    %v1991 = vunpack.c.h.b16 %v1684
    %v1992 = vunpack.c.l.b16 %v1685
    %v1993 = vunpack.c.h.b16 %v1685
    %v1994 = vunpack.c.l.b16 %v1686
    %v1995 = vunpack.c.h.b16 %v1686
    %v1996 = vunpack.c.l.b16 %v1687
    %v1997 = vunpack.c.h.b16 %v1687
    %v1998 = vunpack.c.l.b16 %v1688
    %v1999 = vunpack.c.h.b16 %v1688
    %v2000 = vunpack.c.l.b16 %v1689
    %v2001 = vunpack.c.h.b16 %v1689
    %v2002 = vunpack.c.l.b16 %v1690
    %v2003 = vunpack.c.h.b16 %v1690
    %v2004 = vunpack.c.l.b16 %v1691
    %v2005 = vunpack.c.h.b16 %v1691
    %v2006 = vunpack.c.l.b16 %v1692
    %v2007 = vunpack.c.h.b16 %v1692
    %v2008 = vunpack.c.l.b16 %v1693
    %v2009 = vunpack.c.h.b16 %v1693
    %v2010 = vunpack.c.l.b16 %v1694
    %v2011 = vunpack.c.h.b16 %v1694
    %v2012 = vunpack.c.l.b16 %v1695
    %v2013 = vunpack.c.h.b16 %v1695
    %v2014 = vunpack.c.l.b16 %v1696
    %v2015 = vunpack.c.h.b16 %v1696
    %v2016 = vunpack.c.l.b16 %v1697
    %v2017 = vunpack.c.h.b16 %v1697
    %v2018 = vunpack.c.l.b16 %v1698
    %v2019 = vunpack.c.h.b16 %v1698
    %v2020 = vunpack.c.l.b16 %v1699
    %v2021 = vunpack.c.h.b16 %v1699
    %v2022 = vunpack.c.l.b16 %v1700
    %v2023 = vunpack.c.h.b16 %v1700
    %v2024 = vunpack.c.l.b16 %v1701
    %v2025 = vunpack.c.h.b16 %v1701
    %v2026 = vunpack.c.l.b16 %v1702
    %v2027 = vunpack.c.h.b16 %v1702
    %v2028 = vunpack.c.l.b16 %v1703
    %v2029 = vunpack.c.h.b16 %v1703
    %v2030 = vunpack.c.l.b16 %v1704
    %v2031 = vunpack.c.h.b16 %v1704
    %v2032 = vunpack.c.l.b16 %v1705
    %v2033 = vunpack.c.h.b16 %v1705
    %v2034 = vunpack.c.l.b16 %v1706
    %v2035 = vunpack.c.h.b16 %v1706
    %v2036 = vunpack.c.l.b16 %v1707
    %v2037 = vunpack.c.h.b16 %v1707
    %v2038 = vunpack.c.l.b16 %v1708
    %v2039 = vunpack.c.h.b16 %v1708
    %v2040 = vunpack.c.l.b16 %v1709
    %v2041 = vunpack.c.h.b16 %v1709
    %v2042 = vunpack.c.l.b16 %v1710
    %v2043 = vunpack.c.h.b16 %v1710
    %v2044 = vunpack.c.l.b16 %v1711
    %v2045 = vunpack.c.h.b16 %v1711
    %v2046 = vunpack.c.l.b16 %v1712
    %v2047 = vunpack.c.h.b16 %v1712
    %v2048 = vunpack.c.l.b16 %v1713
    %v2049 = vunpack.c.h.b16 %v1713
    %v2050 = vpack.c.b16 %v1828, %v1826
    %v2051 = vpack.c.b16 %v1829, %v1827
    %v2052 = vpack.c.b16 %v1832, %v1830
    %v2053 = vpack.c.b16 %v1833, %v1831
    %v2054 = vpack.c.b16 %v1836, %v1834
    %v2055 = vpack.c.b16 %v1837, %v1835
    %v2056 = vpack.c.b16 %v1840, %v1838
    %v2057 = vpack.c.b16 %v1841, %v1839
    %v2058 = vpack.c.b16 %v1844, %v1842
    %v2059 = vpack.c.b16 %v1845, %v1843
    %v2060 = vpack.c.b16 %v1848, %v1846
    %v2061 = vpack.c.b16 %v1849, %v1847
    %v2062 = vpack.c.b16 %v1852, %v1850
    %v2063 = vpack.c.b16 %v1853, %v1851
    %v2064 = vpack.c.b16 %v1856, %v1854
    %v2065 = vpack.c.b16 %v1857, %v1855
    %v2066 = vpack.c.b16 %v1860, %v1858
    %v2067 = vpack.c.b16 %v1861, %v1859
    %v2068 = vpack.c.b16 %v1864, %v1862
    %v2069 = vpack.c.b16 %v1865, %v1863
    %v2070 = vpack.c.b16 %v1868, %v1866
    %v2071 = vpack.c.b16 %v1869, %v1867
    %v2072 = vpack.c.b16 %v1872, %v1870
    %v2073 = vpack.c.b16 %v1873, %v1871
    %v2074 = vpack.c.b16 %v1876, %v1874
    %v2075 = vpack.c.b16 %v1877, %v1875
    %v2076 = vpack.c.b16 %v1880, %v1878
    %v2077 = vpack.c.b16 %v1881, %v1879
    %v2078 = vpack.c.b16 %v1884, %v1882
    %v2079 = vpack.c.b16 %v1885, %v1883
    %v2080 = vpack.c.b16 %v1888, %v1886
    %v2081 = vpack.c.b16 %v1889, %v1887
    %v2082 = vpack.c.b16 %v1892, %v1890
    %v2083 = vpack.c.b16 %v1893, %v1891
    %v2084 = vpack.c.b16 %v1896, %v1894
    %v2085 = vpack.c.b16 %v1897, %v1895
    %v2086 = vpack.c.b16 %v1900, %v1898
    %v2087 = vpack.c.b16 %v1901, %v1899
    %v2088 = vpack.c.b16 %v1904, %v1902
    %v2089 = vpack.c.b16 %v1905, %v1903
    %v2090 = vpack.c.b16 %v1908, %v1906
    %v2091 = vpack.c.b16 %v1909, %v1907
    %v2092 = vpack.c.b16 %v1912, %v1910
    %v2093 = vpack.c.b16 %v1913, %v1911
    %v2094 = vpack.c.b16 %v1916, %v1914
    %v2095 = vpack.c.b16 %v1917, %v1915
    %v2096 = vpack.c.b16 %v1920, %v1918
    %v2097 = vpack.c.b16 %v1921, %v1919
    %v2098 = vpack.c.b16 %v1924, %v1922
    %v2099 = vpack.c.b16 %v1925, %v1923
    %v2100 = vpack.c.b16 %v1928, %v1926
    %v2101 = vpack.c.b16 %v1929, %v1927
    %v2102 = vpack.c.b16 %v1932, %v1930
    %v2103 = vpack.c.b16 %v1933, %v1931
    %v2104 = vpack.c.b16 %v1936, %v1934
    %v2105 = vpack.c.b16 %v1937, %v1935
    %v2106 = vpack.c.b16 %v1940, %v1938
    %v2107 = vpack.c.b16 %v1941, %v1939
    %v2108 = vpack.c.b16 %v1944, %v1942
    %v2109 = vpack.c.b16 %v1945, %v1943
    %v2110 = vpack.c.b16 %v1948, %v1946
    %v2111 = vpack.c.b16 %v1949, %v1947
    %v2112 = vpack.c.b16 %v1952, %v1950
    %v2113 = vpack.c.b16 %v1953, %v1951
    %v2114 = vpack.c.b16 %v1956, %v1954
    %v2115 = vpack.c.b16 %v1957, %v1955
    %v2116 = vpack.c.b16 %v1960, %v1958
    %v2117 = vpack.c.b16 %v1961, %v1959
    %v2118 = vpack.c.b16 %v1964, %v1962
    %v2119 = vpack.c.b16 %v1965, %v1963
    %v2120 = vpack.c.b16 %v1968, %v1966
    %v2121 = vpack.c.b16 %v1969, %v1967
    %v2122 = vpack.c.b16 %v1972, %v1970
    %v2123 = vpack.c.b16 %v1973, %v1971
    %v2124 = vpack.c.b16 %v1976, %v1974
    %v2125 = vpack.c.b16 %v1977, %v1975
    %v2126 = vpack.c.b16 %v1980, %v1978
    %v2127 = vpack.c.b16 %v1981, %v1979
    %v2128 = vpack.c.b16 %v1984, %v1982
    %v2129 = vpack.c.b16 %v1985, %v1983
    %v2130 = vpack.c.b16 %v1988, %v1986
    %v2131 = vpack.c.b16 %v1989, %v1987
    %v2132 = vpack.c.b16 %v1992, %v1990
    %v2133 = vpack.c.b16 %v1993, %v1991
    %v2134 = vpack.c.b16 %v1996, %v1994
    %v2135 = vpack.c.b16 %v1997, %v1995
    %v2136 = vpack.c.b16 %v2000, %v1998
    %v2137 = vpack.c.b16 %v2001, %v1999
    %v2138 = vpack.c.b16 %v2004, %v2002
    %v2139 = vpack.c.b16 %v2005, %v2003
    %v2140 = vpack.c.b16 %v2008, %v2006
    %v2141 = vpack.c.b16 %v2009, %v2007
    %v2142 = vpack.c.b16 %v2012, %v2010
    %v2143 = vpack.c.b16 %v2013, %v2011
    %v2144 = vpack.c.b16 %v2016, %v2014
    %v2145 = vpack.c.b16 %v2017, %v2015
    %v2146 = vpack.c.b16 %v2020, %v2018
    %v2147 = vpack.c.b16 %v2021, %v2019
    %v2148 = vpack.c.b16 %v2024, %v2022
    %v2149 = vpack.c.b16 %v2025, %v2023
    %v2150 = vpack.c.b16 %v2028, %v2026
    %v2151 = vpack.c.b16 %v2029, %v2027
    %v2152 = vpack.c.b16 %v2032, %v2030
    %v2153 = vpack.c.b16 %v2033, %v2031
    %v2154 = vpack.c.b16 %v2036, %v2034
    %v2155 = vpack.c.b16 %v2037, %v2035
    %v2156 = vpack.c.b16 %v2040, %v2038
    %v2157 = vpack.c.b16 %v2041, %v2039
    %v2158 = vpack.c.b16 %v2044, %v2042
    %v2159 = vpack.c.b16 %v2045, %v2043
    %v2160 = vpack.c.b16 %v2048, %v2046
    %v2161 = vpack.c.b16 %v2049, %v2047
    %2274 = vmatprep.subr.bf16.mxu0 %v2051
    %2275 = vmatpush1.bf16.msra.mxu0 %v2050
    %2276 = vmatprep.subr.bf16.mxu0 %v2053
    %2277 = vmatpush1.bf16.msra.mxu0 %v2052
    %2278 = vmatprep.subr.bf16.mxu0 %v2055
    %2279 = vmatpush1.bf16.msra.mxu0 %v2054
    %2280 = vmatprep.subr.bf16.mxu0 %v2057
    %2281 = vmatpush1.bf16.msra.mxu0 %v2056
    %2282 = vmatprep.subr.bf16.mxu0 %v2059
    %2283 = vmatpush1.bf16.msra.mxu0 %v2058
    %2284 = vmatprep.subr.bf16.mxu0 %v2061
    %2285 = vmatpush1.bf16.msra.mxu0 %v2060
    %2286 = vmatprep.subr.bf16.mxu0 %v2063
    %2287 = vmatpush1.bf16.msra.mxu0 %v2062
    %2288 = vmatprep.subr.bf16.mxu0 %v2065
    %2289 = vmatpush1.bf16.msra.mxu0 %v2064
    %2290 = vmatprep.subr.bf16.mxu0 %v2067
    %2291 = vmatpush1.bf16.msra.mxu0 %v2066
    %2292 = vmatprep.subr.bf16.mxu0 %v2069
    %2293 = vmatpush1.bf16.msra.mxu0 %v2068
    %2294 = vmatprep.subr.bf16.mxu0 %v2071
    %2295 = vmatpush1.bf16.msra.mxu0 %v2070
    %2296 = vmatprep.subr.bf16.mxu0 %v2073
    %2297 = vmatpush1.bf16.msra.mxu0 %v2072
    %2298 = vmatprep.subr.bf16.mxu0 %v2075
    %2299 = vmatpush1.bf16.msra.mxu0 %v2074
    %2300 = vmatprep.subr.bf16.mxu0 %v2077
    %2301 = vmatpush1.bf16.msra.mxu0 %v2076
    %2302 = vmatprep.subr.bf16.mxu0 %v2079
    %2303 = vmatpush1.bf16.msra.mxu0 %v2078
    %2304 = vmatprep.subr.bf16.mxu0 %v2081
    %2305 = vmatpush1.bf16.msra.mxu0 %v2080
    %2306 = vmatprep.mubr.bf16.mxu0 %v1596
    %2307 = vmatmul.mubr.bf16.gmra.mrb[0].mxu0 %v1595
    %v2308 = vpop.f32.mrb[0].mxu0
    %v2309 = vadd.f32 0.0, %v2308
    %v2310 = vpop.f32.mrb[0].mxu0
    %v2311 = vadd.f32 0.0, %v2310
    %v2312 = vpop.f32.mrb[0].mxu0
    %v2313 = vadd.f32 0.0, %v2312
    %v2314 = vpop.f32.mrb[0].mxu0
    %v2315 = vadd.f32 0.0, %v2314
    %2316 = vdwg.mxu0
    %2317 = vmatprep.subr.bf16.mxu0 %v2083
    %2318 = vmatpush1.bf16.msra.mxu0 %v2082
    %2319 = vmatprep.subr.bf16.mxu0 %v2085
    %2320 = vmatpush1.bf16.msra.mxu0 %v2084
    %2321 = vmatprep.subr.bf16.mxu0 %v2087
    %2322 = vmatpush1.bf16.msra.mxu0 %v2086
    %2323 = vmatprep.subr.bf16.mxu0 %v2089
    %2324 = vmatpush1.bf16.msra.mxu0 %v2088
    %2325 = vmatprep.subr.bf16.mxu0 %v2091
    %2326 = vmatpush1.bf16.msra.mxu0 %v2090
    %2327 = vmatprep.subr.bf16.mxu0 %v2093
    %2328 = vmatpush1.bf16.msra.mxu0 %v2092
    %2329 = vmatprep.subr.bf16.mxu0 %v2095
    %2330 = vmatpush1.bf16.msra.mxu0 %v2094
    %2331 = vmatprep.subr.bf16.mxu0 %v2097
    %2332 = vmatpush1.bf16.msra.mxu0 %v2096
    %2333 = vmatprep.subr.bf16.mxu0 %v2099
    %2334 = vmatpush1.bf16.msra.mxu0 %v2098
    %2335 = vmatprep.subr.bf16.mxu0 %v2101
    %2336 = vmatpush1.bf16.msra.mxu0 %v2100
    %2337 = vmatprep.subr.bf16.mxu0 %v2103
    %2338 = vmatpush1.bf16.msra.mxu0 %v2102
    %2339 = vmatprep.subr.bf16.mxu0 %v2105
    %2340 = vmatpush1.bf16.msra.mxu0 %v2104
    %2341 = vmatprep.subr.bf16.mxu0 %v2107
    %2342 = vmatpush1.bf16.msra.mxu0 %v2106
    %2343 = vmatprep.subr.bf16.mxu0 %v2109
    %2344 = vmatpush1.bf16.msra.mxu0 %v2108
    %2345 = vmatprep.subr.bf16.mxu0 %v2111
    %2346 = vmatpush1.bf16.msra.mxu0 %v2110
    %2347 = vmatprep.subr.bf16.mxu0 %v2113
    %2348 = vmatpush1.bf16.msra.mxu0 %v2112
    %2349 = vmatprep.mubr.bf16.mxu0 %v1598
    %2350 = vmatmul.mubr.bf16.gmra.mrb[0].mxu0 %v1597
    %v2351 = vpop.f32.mrb[0].mxu0
    %v2352 = vadd.f32 %v2309, %v2351
    %v2353 = vpop.f32.mrb[0].mxu0
    %v2354 = vadd.f32 %v2311, %v2353
    %v2355 = vpop.f32.mrb[0].mxu0
    %v2356 = vadd.f32 %v2313, %v2355
    %v2357 = vpop.f32.mrb[0].mxu0
    %v2358 = vadd.f32 %v2315, %v2357
    %2359 = vdwg.mxu0
    %2360 = vmatprep.subr.bf16.mxu0 %v2115
    %2361 = vmatpush1.bf16.msra.mxu0 %v2114
    %2362 = vmatprep.subr.bf16.mxu0 %v2117
    %2363 = vmatpush1.bf16.msra.mxu0 %v2116
    %2364 = vmatprep.subr.bf16.mxu0 %v2119
    %2365 = vmatpush1.bf16.msra.mxu0 %v2118
    %2366 = vmatprep.subr.bf16.mxu0 %v2121
    %2367 = vmatpush1.bf16.msra.mxu0 %v2120
    %2368 = vmatprep.subr.bf16.mxu0 %v2123
    %2369 = vmatpush1.bf16.msra.mxu0 %v2122
    %2370 = vmatprep.subr.bf16.mxu0 %v2125
    %2371 = vmatpush1.bf16.msra.mxu0 %v2124
    %2372 = vmatprep.subr.bf16.mxu0 %v2127
    %2373 = vmatpush1.bf16.msra.mxu0 %v2126
    %2374 = vmatprep.subr.bf16.mxu0 %v2129
    %2375 = vmatpush1.bf16.msra.mxu0 %v2128
    %2376 = vmatprep.subr.bf16.mxu0 %v2131
    %2377 = vmatpush1.bf16.msra.mxu0 %v2130
    %2378 = vmatprep.subr.bf16.mxu0 %v2133
    %2379 = vmatpush1.bf16.msra.mxu0 %v2132
    %2380 = vmatprep.subr.bf16.mxu0 %v2135
    %2381 = vmatpush1.bf16.msra.mxu0 %v2134
    %2382 = vmatprep.subr.bf16.mxu0 %v2137
    %2383 = vmatpush1.bf16.msra.mxu0 %v2136
    %2384 = vmatprep.subr.bf16.mxu0 %v2139
    %2385 = vmatpush1.bf16.msra.mxu0 %v2138
    %2386 = vmatprep.subr.bf16.mxu0 %v2141
    %2387 = vmatpush1.bf16.msra.mxu0 %v2140
    %2388 = vmatprep.subr.bf16.mxu0 %v2143
    %2389 = vmatpush1.bf16.msra.mxu0 %v2142
    %2390 = vmatprep.subr.bf16.mxu0 %v2145
    %2391 = vmatpush1.bf16.msra.mxu0 %v2144
    %2392 = vmatprep.mubr.bf16.mxu0 %v1600
    %2393 = vmatmul.mubr.bf16.gmra.mrb[0].mxu0 %v1599
    %v2394 = vpop.f32.mrb[0].mxu0
    %v2395 = vadd.f32 %v2352, %v2394
    %v2396 = vpop.f32.mrb[0].mxu0
    %v2397 = vadd.f32 %v2354, %v2396
    %v2398 = vpop.f32.mrb[0].mxu0
    %v2399 = vadd.f32 %v2356, %v2398
    %v2400 = vpop.f32.mrb[0].mxu0
    %v2401 = vadd.f32 %v2358, %v2400
    %2402 = vdwg.mxu0
    %2403 = vmatprep.subr.bf16.mxu0 %v2147
    %2404 = vmatpush1.bf16.msra.mxu0 %v2146
    %2405 = vmatprep.subr.bf16.mxu0 %v2149
    %2406 = vmatpush1.bf16.msra.mxu0 %v2148
    %2407 = vmatprep.subr.bf16.mxu0 %v2151
    %2408 = vmatpush1.bf16.msra.mxu0 %v2150
    %2409 = vmatprep.subr.bf16.mxu0 %v2153
    %2410 = vmatpush1.bf16.msra.mxu0 %v2152
    %2411 = vmatprep.subr.bf16.mxu0 %v2155
    %2412 = vmatpush1.bf16.msra.mxu0 %v2154
    %2413 = vmatprep.subr.bf16.mxu0 %v2157
    %2414 = vmatpush1.bf16.msra.mxu0 %v2156
    %2415 = vmatprep.subr.bf16.mxu0 %v2159
    %2416 = vmatpush1.bf16.msra.mxu0 %v2158
    %2417 = vmatprep.subr.bf16.mxu0 %v2161
    %2418 = vmatpush1.bf16.msra.mxu0 %v2160
    %2419 = vmatprep.subr.bf16.mxu0 0
    %2420 = vmatpush1.bf16.msra.mxu0 0
    %2421 = vmatprep.subr.bf16.mxu0 0
    %2422 = vmatpush1.bf16.msra.mxu0 0
    %2423 = vmatprep.subr.bf16.mxu0 0
    %2424 = vmatpush1.bf16.msra.mxu0 0
    %2425 = vmatprep.subr.bf16.mxu0 0
    %2426 = vmatpush1.bf16.msra.mxu0 0
    %2427 = vmatprep.subr.bf16.mxu0 0
    %2428 = vmatpush1.bf16.msra.mxu0 0
    %2429 = vmatprep.subr.bf16.mxu0 0
    %2430 = vmatpush1.bf16.msra.mxu0 0
    %2431 = vmatprep.subr.bf16.mxu0 0
    %2432 = vmatpush1.bf16.msra.mxu0 0
    %2433 = vmatprep.subr.bf16.mxu0 0
    %2434 = vmatpush1.bf16.msra.mxu0 0
    %2435 = vmatprep.mubr.bf16.mxu0 0
    %2436 = vmatmul.mubr.bf16.gmra.mrb[0].mxu0 %v1601
    %v2437 = vpop.f32.mrb[0].mxu0
    %v2438 = vadd.f32 %v2395, %v2437
    %v2439 = vpop.f32.mrb[0].mxu0
    %v2440 = vadd.f32 %v2397, %v2439
    %v2441 = vpop.f32.mrb[0].mxu0
    %v2442 = vadd.f32 %v2399, %v2441
    %v2443 = vpop.f32.mrb[0].mxu0
    %v2444 = vadd.f32 %v2401, %v2443
    %2445 = vdwg.mxu0
    %s2446 = scalar_lea.vmem %s1, 6
    %v2447 = vld [vmem:[%s2446] sm:$0x1]
    %v2449 = vlaneseq
    %v2450 = vshrl.u32 %v2449, 7
    %v2451 = vsub.s32 0, %v2450
    %v2452 = vrot.slane %v2447, %v2451
    %v2454 = vadd.f32 %v2438, %v2452
    %v2455 = vadd.f32 %v2442, %v2452
    %v2456 = vmax.f32 %v2454, 0.0
    %v2457 = vmax.f32 %v2455, 0.0
    %v2458 = vpack.c.bf16 %v2457, %v2456
    %s2459 = scalar_lea.vmem [#allocation5], 192
    %v2460 = vld [vmem:[%s2459] sm:$0xf]
    %v2461 = vld [vmem:[%s2459 + $0x4] sm:$0xf]
    %v2462 = vld [vmem:[%s2459 + $0x8] sm:$0xf]
    %v2463 = vld [vmem:[%s2459 + $0xc] sm:$0xf]
    %v2464 = vld [vmem:[%s2459 + $0x10] sm:$0xf]
    %v2465 = vld [vmem:[%s2459 + $0x14] sm:$0xf]
    %v2466 = vld [vmem:[%s2459 + $0x18] sm:$0xf]
    %v2467 = vld [vmem:[%s2459 + $0x1c] sm:$0xf]
    %v2468 = vld [vmem:[%s2459 + $0x20] sm:$0xf]
    %v2469 = vld [vmem:[%s2459 + $0x24] sm:$0xf]
    %v2470 = vld [vmem:[%s2459 + $0x28] sm:$0xf]
    %v2471 = vld [vmem:[%s2459 + $0x2c] sm:$0xf]
    %v2472 = vld [vmem:[%s2459 + $0x30] sm:$0xf]
    %v2473 = vld [vmem:[%s2459 + $0x34] sm:$0xf]
    %v2474 = vld [vmem:[%s2459 + $0x38] sm:$0xf]
    %v2475 = vld [vmem:[%s2459 + $0x3c] sm:$0xf]
    %v2492 = vunpack.c.l.b16 %v2460
    %v2493 = vunpack.c.l.b16 %v2461
    %v2494 = vunpack.c.l.b16 %v2462
    %v2495 = vunpack.c.l.b16 %v2463
    %v2496 = vunpack.c.l.b16 %v2464
    %v2497 = vunpack.c.l.b16 %v2465
    %v2498 = vunpack.c.l.b16 %v2466
    %v2499 = vunpack.c.l.b16 %v2467
    %v2500 = vunpack.c.l.b16 %v2468
    %v2501 = vunpack.c.l.b16 %v2469
    %v2502 = vunpack.c.l.b16 %v2470
    %v2503 = vunpack.c.l.b16 %v2471
    %v2504 = vunpack.c.l.b16 %v2472
    %v2505 = vunpack.c.l.b16 %v2473
    %v2506 = vunpack.c.l.b16 %v2474
    %v2507 = vunpack.c.l.b16 %v2475
    %v2508 = vpack.c.b16 %v2493, %v2492
    %v2509 = vpack.c.b16 %v2495, %v2494
    %v2510 = vpack.c.b16 %v2497, %v2496
    %v2511 = vpack.c.b16 %v2499, %v2498
    %v2512 = vpack.c.b16 %v2501, %v2500
    %v2513 = vpack.c.b16 %v2503, %v2502
    %v2514 = vpack.c.b16 %v2505, %v2504
    %v2515 = vpack.c.b16 %v2507, %v2506
    %2524 = vmatprep.subr.bf16.mxu0 0
    %2525 = vmatpush1.bf16.msra.mxu0 %v2508
    %2526 = vmatprep.subr.bf16.mxu0 0
    %2527 = vmatpush1.bf16.msra.mxu0 %v2509
    %2528 = vmatprep.subr.bf16.mxu0 0
    %2529 = vmatpush1.bf16.msra.mxu0 %v2510
    %2530 = vmatprep.subr.bf16.mxu0 0
    %2531 = vmatpush1.bf16.msra.mxu0 %v2511
    %2532 = vmatprep.subr.bf16.mxu0 0
    %2533 = vmatpush1.bf16.msra.mxu0 %v2512
    %2534 = vmatprep.subr.bf16.mxu0 0
    %2535 = vmatpush1.bf16.msra.mxu0 %v2513
    %2536 = vmatprep.subr.bf16.mxu0 0
    %2537 = vmatpush1.bf16.msra.mxu0 %v2514
    %2538 = vmatprep.subr.bf16.mxu0 0
    %2539 = vmatpush1.bf16.msra.mxu0 %v2515
    %2540 = vmatprep.subr.bf16.mxu0 0
    %2541 = vmatpush1.bf16.msra.mxu0 0
    %2542 = vmatprep.subr.bf16.mxu0 0
    %2543 = vmatpush1.bf16.msra.mxu0 0
    %2544 = vmatprep.subr.bf16.mxu0 0
    %2545 = vmatpush1.bf16.msra.mxu0 0
    %2546 = vmatprep.subr.bf16.mxu0 0
    %2547 = vmatpush1.bf16.msra.mxu0 0
    %2548 = vmatprep.subr.bf16.mxu0 0
    %2549 = vmatpush1.bf16.msra.mxu0 0
    %2550 = vmatprep.subr.bf16.mxu0 0
    %2551 = vmatpush1.bf16.msra.mxu0 0
    %2552 = vmatprep.subr.bf16.mxu0 0
    %2553 = vmatpush1.bf16.msra.mxu0 0
    %2554 = vmatprep.subr.bf16.mxu0 0
    %2555 = vmatpush1.bf16.msra.mxu0 0
    %2556 = vmatprep.mubr.bf16.mxu0 0
    %2557 = vmatmul.mubr.bf16.gmra.mrb[0].mxu0 %v2458
    %v2558 = vpop.f32.mrb[0].mxu0
    %v2559 = vadd.f32 0.0, %v2558
    %v2560 = vpop.f32.mrb[0].mxu0
    %v2561 = vpop.f32.mrb[0].mxu0
    %v2562 = vadd.f32 0.0, %v2561
    %v2563 = vpop.f32.mrb[0].mxu0
    %2564 = vdwg.mxu0
    %v2565 = vadd.f32 %v2440, %v2559
    %v2566 = vadd.f32 %v2444, %v2562
    %v2567 = vld [vmem:[%s2] sm:$0x1]
    %v2569 = vlaneseq
    %v2570 = vshrl.u32 %v2569, 7
    %v2571 = vsub.s32 0, %v2570
    %v2572 = vrot.slane %v2567, %v2571
    %v2574 = vadd.f32 %v2565, %v2572
    %v2575 = vadd.f32 %v2566, %v2572
    %2576 = vst [vmem:[%s5] sm:$0xff] %v2574
    %2577 = vst [vmem:[%s5 + $0x8] sm:$0xff] %v2575
    // Predicated region
    $region30: #{dense_skip_forward.1} parent=1 // pred_check
      _
    $region31: #{dense_skip_forward.1} parent=1 // pred_check_branch
      %2579 = sbr.rel (0) target = $region33
    $region32: #{dense_skip_forward.1} parent=1 // pred_region
      _
    $region33: #{dense_skip_forward.1} parent=1 // pred_fallthru
      _
    // Predicated region
    $region34: #{dense_skip_forward.1} parent=1 // pred_check
      _
    $region35: #{dense_skip_forward.1} parent=1 // pred_check_branch
      %2581 = sbr.rel (0) target = $region37
    $region36: #{dense_skip_forward.1} parent=1 // pred_region
      _
    $region37: #{dense_skip_forward.1} parent=1 // pred_fallthru
      _
    %2582 = vsyncpa [#allocation4], 1
    %2583 = vsyncpa [#allocation6], 1

</llo_original>
